<compile_context>
chip_gen: v7x
topology: tpu7x:2x2x1
jax: 0.10.0
libtpu: 0.0.40
codegen_flags: <defaults>
</compile_context>

<pallas_src>
import functools

import jax
import jax.numpy as jnp
from jax.experimental import pallas as pl
from jax.experimental.pallas import tpu as pltpu


def _kernel(x_ref, z_ref, wz_ref, bn_ref, kbn_ref, rep_ref, wconv_ref, mca_ref,
            wfc1_ref, wfc2_ref, out_ref, *, B, H, W, C):
    WC = W * C
    BH = B * H
    EPS = 1e-5
    SLOPE = 0.01  # nn.LeakyReLU default negative_slope

    def leaky(t):
        return jnp.where(t >= 0, t, SLOPE * t)

    def per_batch_rows(v):  # (B, WC) -> (B*H, WC): replicate each batch row over H
        return jnp.broadcast_to(v[:, None, :], (B, H, WC)).reshape(BH, WC)

    rep = rep_ref[...]  # (C, WC) 0/1 replication matrix: per-channel -> lane-dense

    def bn_scale_shift(x2, g_c, b_c):
        # Single-sweep training-mode BatchNorm2d stats: E[x], E[x^2] in one pass;
        # var = E[x^2] - E[x]^2 (biased).  The fold over W lane groups is a tiny
        # exact (WC, C) matmul (kbn), giving per-channel stats; affine folded in.
        s = jnp.sum(x2, axis=0, keepdims=True)                       # (1, WC)
        sq = jnp.sum(x2 * x2, axis=0, keepdims=True)                 # (1, WC)
        stats = jnp.dot(jnp.concatenate([s, sq], axis=0), kbn_ref[...],
                        preferred_element_type=jnp.float32)          # (2, C)
        mean = stats[0:1]
        var = stats[1:2] - mean * mean
        scale = g_c * jax.lax.rsqrt(var + EPS)                       # (1, C)
        shift = b_c - mean * scale                                   # (1, C)
        return scale, shift

    x2 = x_ref[...]                                                  # (BH, WC) f32
    z = z_ref[...]                                                   # (B, ch_z)

    # code embeddings: 1x1 convs on (B, ch_z, 1, 1); per-channel, both stacked.
    zt = jnp.dot(z, wz_ref[...], preferred_element_type=jnp.float32)  # (B, 2*C)
    z1_c = zt[:, :C]
    z2_c = zt[:, C:]

    # ---- stage A: x = x + res(norm1(x) + z1) ----
    sc1, sh1 = bn_scale_shift(x2, bn_ref[0:1], bn_ref[1:2])
    scale1 = jnp.dot(sc1, rep, preferred_element_type=jnp.float32)        # (1, WC)
    shift1 = jnp.dot(z1_c + sh1, rep, preferred_element_type=jnp.float32)  # (B, WC)
    t = x2 * scale1 + per_batch_rows(shift1)                          # norm1(x) + z1

    # 3x3 conv (pad=1, no bias) with the following 1x1 conv folded in on the host.
    # W-axis shift lives in the block-tridiagonal weight; only 3 H-shifted taps are
    # built (zero-padded, one hoisted pad constant) and concatenated along K, so the
    # whole conv is ONE MXU matmul with K = 3*WC (bf16 operands, f32 accumulate).
    t3 = t.reshape(B, H, WC)
    pad = jnp.zeros((B, 1, WC), jnp.float32)
    t_up = jnp.concatenate([pad, t3[:, :H - 1, :]], axis=1)   # dh = -1: row h-1
    t_dn = jnp.concatenate([t3[:, 1:, :], pad], axis=1)       # dh = +1: row h+1
    taps = jnp.concatenate([t_up, t3, t_dn], axis=2).reshape(BH, 3 * WC)
    y2 = jnp.dot(taps.astype(jnp.bfloat16), wconv_ref[...],
                 preferred_element_type=jnp.float32)                  # (BH, WC)

    # ChannelAttention: both pooled branches are avg-pool (faithful to the reference
    # code where y_max = self.avgpool(x)); spatial mean + Conv1d(2->1, k=7, pad=3)
    # band are folded into the (WC, C) mca matrix -> per-channel attention logits.
    pooled = jnp.sum(y2.reshape(B, H, WC), axis=1)                    # (B, WC)
    att = jnp.dot(pooled, mca_ref[...], preferred_element_type=jnp.float32)  # (B, C)
    att = pl.reciprocal(1.0 + jnp.exp(-att), approx=True)             # sigmoid (EUP)
    att_rows = jnp.dot(att, rep, preferred_element_type=jnp.float32)  # (B, WC)
    x1 = x2 + leaky(y2 * per_batch_rows(att_rows))

    # ---- stage B: x = x + mlp(norm2(x) + z2) ----
    sc2, sh2 = bn_scale_shift(x1, bn_ref[2:3], bn_ref[3:4])
    scale2 = jnp.dot(sc2, rep, preferred_element_type=jnp.float32)
    shift2 = jnp.dot(z2_c + sh2, rep, preferred_element_type=jnp.float32)
    t2 = x1 * scale2 + per_batch_rows(shift2)                         # norm2(x) + z2
    h = leaky(jnp.dot(t2.astype(jnp.bfloat16), wfc1_ref[...],
                      preferred_element_type=jnp.float32))            # (BH, W*4C)
    m = jnp.dot(h.astype(jnp.bfloat16), wfc2_ref[...],
                preferred_element_type=jnp.float32)                   # (BH, WC)
    out_ref[...] = x1 + m


def pack_params(p, B, H, W, C):
    """Host-side weight packing (PyTorch OIHW -> lane-dense kernel layout).

    Called ONCE per parameter set, outside the per-step jit; the packed arrays are
    reused across forward calls (no per-call kron/tile/concat work).
    """
    f32 = jnp.float32
    WC = W * C
    eye_c = jnp.eye(C, dtype=f32)
    eye_w = jnp.eye(W, dtype=f32)

    w3_k = jnp.transpose(p["w3"], (2, 3, 1, 0)).astype(f32)          # (3,3,Cin,Cout)
    w1_k = jnp.transpose(p["w1"][:, :, 0, 0]).astype(f32)            # (Cin,Cout)
    # Fold conv1x1 into conv3x3 (exact: both linear, no nonlinearity between), then
    # fold the W-axis (dw) shift into block-tridiagonal (WC, WC) weights, one per dh.
    # Boundary (padding=1) handling is automatic: eye(W, k) zeroes out-of-range taps.
    blocks = []
    for kh in range(3):
        blk = sum(jnp.kron(jnp.eye(W, k=1 - kw, dtype=f32), w3_k[kh, kw] @ w1_k)
                  for kw in range(3))
        blocks.append(blk)
    wconv = jnp.concatenate(blocks, axis=0).astype(jnp.bfloat16)      # (3*WC, WC)

    # ChannelAttention Conv1d(2->1, k=7, pad=3, no bias): both branches see the same
    # avg-pool, so pre-sum the two filter rows into one CxC band matrix, fold in the
    # spatial mean (1/(H*W)) and the W lane-group fold -> (WC, C) matrix.
    m_sum = sum((p["wca"][0, 0, k] + p["wca"][0, 1, k]) * jnp.eye(C, k=3 - k, dtype=f32)
                for k in range(7))
    mca = jnp.tile(m_sum, (W, 1)) / float(H * W)                      # (WC, C)

    # per-channel fold matrix for BatchNorm statistics, and the lane replication
    # matrix (per-channel -> lane-dense), both tiny.
    kbn = jnp.tile(eye_c, (W, 1)) / float(B * H * W)                  # (WC, C)
    rep = jnp.tile(eye_c, (1, W))                                     # (C, WC)

    # BatchNorm affine params, per-channel, packed into one (4, C) input.
    bn = jnp.stack([p["g1"].astype(f32), p["b1"].astype(f32),
                    p["g2"].astype(f32), p["b2"].astype(f32)])

    # z-path 1x1 convs, per-channel, stacked into one (ch_z, 2*C) weight.
    wz = jnp.concatenate([jnp.transpose(p["wz1"][:, :, 0, 0]).astype(f32),
                          jnp.transpose(p["wz2"][:, :, 0, 0]).astype(f32)], axis=1)

    # MLP 1x1 convs as block-diagonal lane-dense weights (bf16 MXU operands).
    wfc1_b = jnp.kron(eye_w, jnp.transpose(p["wfc1"][:, :, 0, 0]).astype(f32)
                      ).astype(jnp.bfloat16)                          # (WC, W*4C)
    wfc2_b = jnp.kron(eye_w, jnp.transpose(p["wfc2"][:, :, 0, 0]).astype(f32)
                      ).astype(jnp.bfloat16)                          # (W*4C, WC)

    return dict(wz=wz, bn=bn, kbn=kbn, rep=rep, wconv=wconv, mca=mca,
                wfc1=wfc1_b, wfc2=wfc2_b)


@jax.jit
def code_embed_conv_forward(x_nhwc, z, packed):
    B, H, W, C = x_nhwc.shape
    WC = W * C
    BH = B * H
    W4C = packed["wfc1"].shape[1]

    # lane-dense activation layout: (B*H, W*C); W*C = 128 here -> full vreg lanes.
    x2 = x_nhwc.reshape(BH, WC)

    flops = (2 * BH * (3 * WC) * WC          # conv (block-tridiagonal matmul)
             + 2 * BH * WC * W4C             # fc1
             + 2 * BH * W4C * WC             # fc2
             + 16 * BH * WC)                 # elementwise / stats (approx)
    bytes_accessed = (2 * BH * WC * 4        # x in + out (f32)
                      + 3 * WC * WC * 2      # wconv (bf16)
                      + 2 * WC * W4C * 2     # fc1 + fc2 (bf16)
                      + 8 * WC * 4)          # small side inputs (approx)
    cost = pl.CostEstimate(flops=flops, transcendentals=2 * B * C,
                           bytes_accessed=bytes_accessed)

    vmem = pl.BlockSpec(memory_space=pltpu.MemorySpace.VMEM)
    out2 = pl.pallas_call(
        functools.partial(_kernel, B=B, H=H, W=W, C=C),
        out_shape=jax.ShapeDtypeStruct((BH, WC), jnp.float32),
        in_specs=[vmem] * 10,
        out_specs=vmem,
        cost_estimate=cost,
        compiler_params=pltpu.CompilerParams(vmem_limit_bytes=32 * 1024 * 1024),
    )(x2, z.astype(jnp.float32), packed["wz"], packed["bn"], packed["kbn"],
      packed["rep"], packed["wconv"], packed["mca"], packed["wfc1"], packed["wfc2"])
    return out2.reshape(B, H, W, C)


def reference_forward(x_nchw, z, p):
    """Plain-JAX (NCHW) reference mirroring the PyTorch forward."""
    EPS = 1e-5
    SLOPE = 0.01
    B, C, H, W = x_nchw.shape

    def bn(t, g, b):
        mean = t.mean(axis=(0, 2, 3), keepdims=True)
        var = ((t - mean) ** 2).mean(axis=(0, 2, 3), keepdims=True)
        return (t - mean) / jnp.sqrt(var + EPS) * g.reshape(1, C, 1, 1) + b.reshape(1, C, 1, 1)

    def conv(t, w, pad):
        return jax.lax.conv_general_dilated(
            t, w, (1, 1), [(pad, pad), (pad, pad)],
            dimension_numbers=("NCHW", "OIHW", "NCHW"))

    def leaky(t):
        return jnp.where(t >= 0, t, SLOPE * t)

    z4 = z[:, :, None, None]
    z1 = conv(z4, p["wz1"], 0)
    z2 = conv(z4, p["wz2"], 0)

    t = bn(x_nchw, p["g1"], p["b1"]) + z1
    y = conv(t, p["w3"], 1)
    y = conv(y, p["w1"], 0)
    y_avg = y.mean(axis=(2, 3))
    y_max = y.mean(axis=(2, 3))  # reference module uses avgpool for "max" too
    wca = p["wca"]
    pad_avg = jnp.pad(y_avg, ((0, 0), (3, 3)))
    pad_max = jnp.pad(y_max, ((0, 0), (3, 3)))
    att = jnp.zeros_like(y_avg)
    for k in range(7):
        att = att + wca[0, 0, k] * pad_avg[:, k:k + C] + wca[0, 1, k] * pad_max[:, k:k + C]
    att = jax.nn.sigmoid(att)
    y = y * att[:, :, None, None]
    x1 = x_nchw + leaky(y)

    t2 = bn(x1, p["g2"], p["b2"]) + z2
    h = leaky(conv(t2, p["wfc1"], 0))
    m = conv(h, p["wfc2"], 0)
    return x1 + m


if __name__ == "__main__":
    # TODO(synk): AlignFusionModule (grid_sample 'nearest') path is not exercised here
    # (forward called with Y=None); its data-dependent gather has no clean BlockSpec form.
    # TODO(synk): at realistic feature-map sizes this monolithic kernel needs a tiled
    # grid (BH tiles >= 256 rows for the 256-wide MXUs on v6e/v7x; roughly half the
    # v6e tile on v7x's 64 MiB VMEM) with the global BatchNorm / channel-attention
    # stats hoisted into a separate reduction pre-pass, and the block-diagonal weights
    # should switch to im2col (B*H*W, 3C)/(B*H*W, 9C) once W*C grows beyond a few vregs.
    B, C, H, W = 2, 8, 16, 16           # W * C = 128 -> lane-dense layout
    CH_Z, MLP_RATIO = 4, 4
    CHID = C * MLP_RATIO

    key = jax.random.PRNGKey(0)
    ks = jax.random.split(key, 10)
    x_nchw = jax.random.normal(ks[0], (B, C, H, W), jnp.float32)
    z = jax.random.normal(ks[1], (B, CH_Z), jnp.float32)

    params = {
        "w3":   jax.random.normal(ks[2], (C, C, 3, 3), jnp.float32) / (3.0 * jnp.sqrt(float(C))),
        "w1":   jax.random.normal(ks[3], (C, C, 1, 1), jnp.float32) / jnp.sqrt(float(C)),
        "wca":  jax.random.normal(ks[4], (1, 2, 7), jnp.float32) * 0.3,
        "wz1":  jax.random.normal(ks[5], (C, CH_Z, 1, 1), jnp.float32) / jnp.sqrt(float(CH_Z)),
        "wz2":  jax.random.normal(ks[6], (C, CH_Z, 1, 1), jnp.float32) / jnp.sqrt(float(CH_Z)),
        "wfc1": jax.random.normal(ks[7], (CHID, C, 1, 1), jnp.float32) / jnp.sqrt(float(C)),
        "wfc2": jax.random.normal(ks[8], (C, CHID, 1, 1), jnp.float32) / jnp.sqrt(float(CHID)),
        "g1": jnp.ones((C,), jnp.float32), "b1": jnp.zeros((C,), jnp.float32),
        "g2": jnp.ones((C,), jnp.float32), "b2": jnp.zeros((C,), jnp.float32),
    }

    # Pack weights ONCE (outside the per-step jit); reuse across forward calls.
    packed = jax.tree_util.tree_map(jax.block_until_ready,
                                    pack_params(params, B, H, W, C))

    x_nhwc = jnp.transpose(x_nchw, (0, 2, 3, 1))
    out_nhwc = code_embed_conv_forward(x_nhwc, z, packed)
    out_nhwc = jax.block_until_ready(out_nhwc)

    ref = reference_forward(x_nchw, z, params)
    got = jnp.transpose(out_nhwc, (0, 3, 1, 2))
    assert got.shape == ref.shape == (B, C, H, W)
    # tolerance accommodates bf16 MXU operands (f32 accumulation) in the conv / MLP
    # matmuls plus XLA's own TPU matmul/conv precision defaults in the reference.
    assert jnp.allclose(got, ref, rtol=3e-2, atol=3e-2), (
        f"max abs err = {jnp.max(jnp.abs(got - ref))}")
    print("KERNEL_OK")
</pallas_src>

<mosaic_0001>
module attributes {stable_mosaic.version = 11 : i64} {
  func.func @_kernel(%arg0: memref<32x128xf32, #tpu.memory_space<vmem>>, %arg1: memref<2x4xf32, #tpu.memory_space<vmem>>, %arg2: memref<4x16xf32, #tpu.memory_space<vmem>>, %arg3: memref<4x8xf32, #tpu.memory_space<vmem>>, %arg4: memref<128x8xf32, #tpu.memory_space<vmem>>, %arg5: memref<8x128xf32, #tpu.memory_space<vmem>>, %arg6: memref<384x128xbf16, #tpu.memory_space<vmem>>, %arg7: memref<128x8xf32, #tpu.memory_space<vmem>>, %arg8: memref<128x512xbf16, #tpu.memory_space<vmem>>, %arg9: memref<512x128xbf16, #tpu.memory_space<vmem>>, %arg10: memref<32x128xf32, #tpu.memory_space<vmem>>) attributes {dimension_semantics = [], scalar_prefetch = 0 : i64, scratch_operands = 0 : i64, tpu.core_type = #tpu.core_type<tc>} {
    %c0 = arith.constant 0 : index
    %c0_0 = arith.constant 0 : index
    %0 = vector.load %arg5[%c0, %c0_0] : memref<8x128xf32, #tpu.memory_space<vmem>>, vector<8x128xf32>
    %c0_1 = arith.constant 0 : index
    %c0_2 = arith.constant 0 : index
    %1 = vector.load %arg0[%c0_1, %c0_2] : memref<32x128xf32, #tpu.memory_space<vmem>>, vector<32x128xf32>
    %c0_3 = arith.constant 0 : index
    %c0_4 = arith.constant 0 : index
    %2 = vector.load %arg1[%c0_3, %c0_4] : memref<2x4xf32, #tpu.memory_space<vmem>>, vector<2x4xf32>
    %c0_5 = arith.constant 0 : index
    %c0_6 = arith.constant 0 : index
    %3 = vector.load %arg2[%c0_5, %c0_6] : memref<4x16xf32, #tpu.memory_space<vmem>>, vector<4x16xf32>
    %cst = arith.constant dense<0.000000e+00> : vector<2x16xf32>
    %4 = tpu.matmul %2, %3, %cst {dimension_numbers = #tpu.dot_dimension_numbers<[1], [0], [0], [1], [0, 0, 1, 1], [], []>} : vector<2x4xf32>, vector<4x16xf32>, vector<2x16xf32> -> vector<2x16xf32>
    %5 = vector.extract_strided_slice %4 {offsets = [0, 0], sizes = [2, 8], strides = [1, 1]} : vector<2x16xf32> to vector<2x8xf32>
    %6 = vector.extract_strided_slice %4 {offsets = [0, 8], sizes = [2, 8], strides = [1, 1]} : vector<2x16xf32> to vector<2x8xf32>
    %c0_7 = arith.constant 0 : index
    %c0_8 = arith.constant 0 : index
    %7 = vector.load %arg3[%c0_7, %c0_8] : memref<4x8xf32, #tpu.memory_space<vmem>>, vector<1x8xf32>
    %c1 = arith.constant 1 : index
    %c0_9 = arith.constant 0 : index
    %8 = vector.load %arg3[%c1, %c0_9] : memref<4x8xf32, #tpu.memory_space<vmem>>, vector<1x8xf32>
    %cst_10 = arith.constant dense<0.000000e+00> : vector<128xf32>
    %9 = vector.multi_reduction <add>, %1, %cst_10 [0] : vector<32x128xf32> to vector<128xf32>
    %10 = vector.shape_cast %9 : vector<128xf32> to vector<1x128xf32>
    %11 = arith.mulf %1, %1 : vector<32x128xf32>
    %cst_11 = arith.constant dense<0.000000e+00> : vector<128xf32>
    %12 = vector.multi_reduction <add>, %11, %cst_11 [0] : vector<32x128xf32> to vector<128xf32>
    %13 = vector.shape_cast %12 : vector<128xf32> to vector<1x128xf32>
    %14 = tpu.concatenate %10, %13 in 0 : vector<1x128xf32>, vector<1x128xf32> -> vector<2x128xf32>
    %c0_12 = arith.constant 0 : index
    %c0_13 = arith.constant 0 : index
    %15 = vector.load %arg4[%c0_12, %c0_13] : memref<128x8xf32, #tpu.memory_space<vmem>>, vector<128x8xf32>
    %cst_14 = arith.constant dense<0.000000e+00> : vector<2x8xf32>
    %16 = tpu.matmul %14, %15, %cst_14 {dimension_numbers = #tpu.dot_dimension_numbers<[1], [0], [0], [1], [0, 0, 1, 1], [], []>} : vector<2x128xf32>, vector<128x8xf32>, vector<2x8xf32> -> vector<2x8xf32>
    %17 = vector.extract_strided_slice %16 {offsets = [0, 0], sizes = [1, 8], strides = [1, 1]} : vector<2x8xf32> to vector<1x8xf32>
    %18 = vector.extract_strided_slice %16 {offsets = [1, 0], sizes = [1, 8], strides = [1, 1]} : vector<2x8xf32> to vector<1x8xf32>
    %19 = arith.mulf %17, %17 : vector<1x8xf32>
    %20 = arith.subf %18, %19 : vector<1x8xf32>
    %cst_15 = arith.constant 9.99999974E-6 : f32
    %21 = vector.broadcast %cst_15 : f32 to vector<1x8xf32>
    %22 = arith.addf %20, %21 : vector<1x8xf32>
    %23 = math.rsqrt %22 : vector<1x8xf32>
    %24 = arith.mulf %7, %23 : vector<1x8xf32>
    %25 = arith.mulf %17, %24 : vector<1x8xf32>
    %26 = arith.subf %8, %25 : vector<1x8xf32>
    %cst_16 = arith.constant dense<0.000000e+00> : vector<1x128xf32>
    %27 = tpu.matmul %24, %0, %cst_16 {dimension_numbers = #tpu.dot_dimension_numbers<[1], [0], [0], [1], [0, 0, 1, 1], [], []>} : vector<1x8xf32>, vector<8x128xf32>, vector<1x128xf32> -> vector<1x128xf32>
    %28 = vector.broadcast %26 : vector<1x8xf32> to vector<2x8xf32>
    %29 = arith.addf %5, %28 : vector<2x8xf32>
    %cst_17 = arith.constant dense<0.000000e+00> : vector<2x128xf32>
    %30 = tpu.matmul %29, %0, %cst_17 {dimension_numbers = #tpu.dot_dimension_numbers<[1], [0], [0], [1], [0, 0, 1, 1], [], []>} : vector<2x8xf32>, vector<8x128xf32>, vector<2x128xf32> -> vector<2x128xf32>
    %31 = vector.broadcast %27 : vector<1x128xf32> to vector<32x128xf32>
    %32 = arith.mulf %1, %31 : vector<32x128xf32>
    %33 = vector.shape_cast %30 : vector<2x128xf32> to vector<2x1x128xf32>
    %34 = vector.shape_cast %33 : vector<2x1x128xf32> to vector<2x1x128xf32>
    %35 = vector.broadcast %34 : vector<2x1x128xf32> to vector<2x16x128xf32>
    %36 = vector.shape_cast %35 : vector<2x16x128xf32> to vector<32x128xf32>
    %37 = arith.addf %32, %36 : vector<32x128xf32>
    %38 = vector.shape_cast %37 : vector<32x128xf32> to vector<2x16x128xf32>
    %cst_18 = arith.constant 0.000000e+00 : f32
    %39 = vector.broadcast %cst_18 : f32 to vector<2x1x128xf32>
    %40 = vector.extract_strided_slice %38 {offsets = [0, 0, 0], sizes = [2, 15, 128], strides = [1, 1, 1]} : vector<2x16x128xf32> to vector<2x15x128xf32>
    %41 = tpu.concatenate %39, %40 in 1 : vector<2x1x128xf32>, vector<2x15x128xf32> -> vector<2x16x128xf32>
    %42 = vector.extract_strided_slice %38 {offsets = [0, 1, 0], sizes = [2, 15, 128], strides = [1, 1, 1]} : vector<2x16x128xf32> to vector<2x15x128xf32>
    %43 = tpu.concatenate %42, %39 in 1 : vector<2x15x128xf32>, vector<2x1x128xf32> -> vector<2x16x128xf32>
    %44 = tpu.concatenate %41, %38, %43 in 2 : vector<2x16x128xf32>, vector<2x16x128xf32>, vector<2x16x128xf32> -> vector<2x16x384xf32>
    %45 = vector.shape_cast %44 : vector<2x16x384xf32> to vector<32x384xf32>
    %46 = arith.truncf %45 : vector<32x384xf32> to vector<32x384xbf16>
    %c0_19 = arith.constant 0 : index
    %c0_20 = arith.constant 0 : index
    %47 = vector.load %arg6[%c0_19, %c0_20] : memref<384x128xbf16, #tpu.memory_space<vmem>>, vector<384x128xbf16>
    %cst_21 = arith.constant dense<0.000000e+00> : vector<32x128xf32>
    %48 = tpu.matmul %46, %47, %cst_21 {dimension_numbers = #tpu.dot_dimension_numbers<[1], [0], [0], [1], [0, 0, 1, 1], [], []>} : vector<32x384xbf16>, vector<384x128xbf16>, vector<32x128xf32> -> vector<32x128xf32>
    %49 = vector.shape_cast %48 : vector<32x128xf32> to vector<2x16x128xf32>
    %cst_22 = arith.constant dense<0.000000e+00> : vector<2x128xf32>
    %50 = vector.multi_reduction <add>, %49, %cst_22 [1] : vector<2x16x128xf32> to vector<2x128xf32>
    %c0_23 = arith.constant 0 : index
    %c0_24 = arith.constant 0 : index
    %51 = vector.load %arg7[%c0_23, %c0_24] : memref<128x8xf32, #tpu.memory_space<vmem>>, vector<128x8xf32>
    %cst_25 = arith.constant dense<0.000000e+00> : vector<2x8xf32>
    %52 = tpu.matmul %50, %51, %cst_25 {dimension_numbers = #tpu.dot_dimension_numbers<[1], [0], [0], [1], [0, 0, 1, 1], [], []>} : vector<2x128xf32>, vector<128x8xf32>, vector<2x8xf32> -> vector<2x8xf32>
    %cst_26 = arith.constant 0.000000e+00 : f32
    %53 = vector.broadcast %cst_26 : f32 to vector<2x8xf32>
    %54 = arith.subf %53, %52 : vector<2x8xf32>
    %55 = math.exp %54 : vector<2x8xf32>
    %cst_27 = arith.constant 1.000000e+00 : f32
    %56 = vector.broadcast %cst_27 : f32 to vector<2x8xf32>
    %57 = arith.addf %56, %55 : vector<2x8xf32>
    %58 = tpu.reciprocal %57 {approx = true} : vector<2x8xf32> -> vector<2x8xf32>
    %cst_28 = arith.constant dense<0.000000e+00> : vector<2x128xf32>
    %59 = tpu.matmul %58, %0, %cst_28 {dimension_numbers = #tpu.dot_dimension_numbers<[1], [0], [0], [1], [0, 0, 1, 1], [], []>} : vector<2x8xf32>, vector<8x128xf32>, vector<2x128xf32> -> vector<2x128xf32>
    %60 = vector.shape_cast %59 : vector<2x128xf32> to vector<2x1x128xf32>
    %61 = vector.shape_cast %60 : vector<2x1x128xf32> to vector<2x1x128xf32>
    %62 = vector.broadcast %61 : vector<2x1x128xf32> to vector<2x16x128xf32>
    %63 = vector.shape_cast %62 : vector<2x16x128xf32> to vector<32x128xf32>
    %64 = arith.mulf %48, %63 : vector<32x128xf32>
    %cst_29 = arith.constant 0.000000e+00 : f32
    %65 = vector.broadcast %cst_29 : f32 to vector<32x128xf32>
    %66 = arith.cmpf oge, %64, %65 : vector<32x128xf32>
    %cst_30 = arith.constant 0.00999999977 : f32
    %67 = vector.broadcast %cst_30 : f32 to vector<32x128xf32>
    %68 = arith.mulf %67, %64 : vector<32x128xf32>
    %69 = arith.select %66, %64, %68 : vector<32x128xi1>, vector<32x128xf32>
    %70 = arith.addf %1, %69 : vector<32x128xf32>
    %c2 = arith.constant 2 : index
    %c0_31 = arith.constant 0 : index
    %71 = vector.load %arg3[%c2, %c0_31] : memref<4x8xf32, #tpu.memory_space<vmem>>, vector<1x8xf32>
    %c3 = arith.constant 3 : index
    %c0_32 = arith.constant 0 : index
    %72 = vector.load %arg3[%c3, %c0_32] : memref<4x8xf32, #tpu.memory_space<vmem>>, vector<1x8xf32>
    %cst_33 = arith.constant dense<0.000000e+00> : vector<128xf32>
    %73 = vector.multi_reduction <add>, %70, %cst_33 [0] : vector<32x128xf32> to vector<128xf32>
    %74 = vector.shape_cast %73 : vector<128xf32> to vector<1x128xf32>
    %75 = arith.mulf %70, %70 : vector<32x128xf32>
    %cst_34 = arith.constant dense<0.000000e+00> : vector<128xf32>
    %76 = vector.multi_reduction <add>, %75, %cst_34 [0] : vector<32x128xf32> to vector<128xf32>
    %77 = vector.shape_cast %76 : vector<128xf32> to vector<1x128xf32>
    %78 = tpu.concatenate %74, %77 in 0 : vector<1x128xf32>, vector<1x128xf32> -> vector<2x128xf32>
    %c0_35 = arith.constant 0 : index
    %c0_36 = arith.constant 0 : index
    %79 = vector.load %arg4[%c0_35, %c0_36] : memref<128x8xf32, #tpu.memory_space<vmem>>, vector<128x8xf32>
    %cst_37 = arith.constant dense<0.000000e+00> : vector<2x8xf32>
    %80 = tpu.matmul %78, %79, %cst_37 {dimension_numbers = #tpu.dot_dimension_numbers<[1], [0], [0], [1], [0, 0, 1, 1], [], []>} : vector<2x128xf32>, vector<128x8xf32>, vector<2x8xf32> -> vector<2x8xf32>
    %81 = vector.extract_strided_slice %80 {offsets = [0, 0], sizes = [1, 8], strides = [1, 1]} : vector<2x8xf32> to vector<1x8xf32>
    %82 = vector.extract_strided_slice %80 {offsets = [1, 0], sizes = [1, 8], strides = [1, 1]} : vector<2x8xf32> to vector<1x8xf32>
    %83 = arith.mulf %81, %81 : vector<1x8xf32>
    %84 = arith.subf %82, %83 : vector<1x8xf32>
    %cst_38 = arith.constant 9.99999974E-6 : f32
    %85 = vector.broadcast %cst_38 : f32 to vector<1x8xf32>
    %86 = arith.addf %84, %85 : vector<1x8xf32>
    %87 = math.rsqrt %86 : vector<1x8xf32>
    %88 = arith.mulf %71, %87 : vector<1x8xf32>
    %89 = arith.mulf %81, %88 : vector<1x8xf32>
    %90 = arith.subf %72, %89 : vector<1x8xf32>
    %cst_39 = arith.constant dense<0.000000e+00> : vector<1x128xf32>
    %91 = tpu.matmul %88, %0, %cst_39 {dimension_numbers = #tpu.dot_dimension_numbers<[1], [0], [0], [1], [0, 0, 1, 1], [], []>} : vector<1x8xf32>, vector<8x128xf32>, vector<1x128xf32> -> vector<1x128xf32>
    %92 = vector.broadcast %90 : vector<1x8xf32> to vector<2x8xf32>
    %93 = arith.addf %6, %92 : vector<2x8xf32>
    %cst_40 = arith.constant dense<0.000000e+00> : vector<2x128xf32>
    %94 = tpu.matmul %93, %0, %cst_40 {dimension_numbers = #tpu.dot_dimension_numbers<[1], [0], [0], [1], [0, 0, 1, 1], [], []>} : vector<2x8xf32>, vector<8x128xf32>, vector<2x128xf32> -> vector<2x128xf32>
    %95 = vector.broadcast %91 : vector<1x128xf32> to vector<32x128xf32>
    %96 = arith.mulf %70, %95 : vector<32x128xf32>
    %97 = vector.shape_cast %94 : vector<2x128xf32> to vector<2x1x128xf32>
    %98 = vector.shape_cast %97 : vector<2x1x128xf32> to vector<2x1x128xf32>
    %99 = vector.broadcast %98 : vector<2x1x128xf32> to vector<2x16x128xf32>
    %100 = vector.shape_cast %99 : vector<2x16x128xf32> to vector<32x128xf32>
    %101 = arith.addf %96, %100 : vector<32x128xf32>
    %102 = arith.truncf %101 : vector<32x128xf32> to vector<32x128xbf16>
    %c0_41 = arith.constant 0 : index
    %c0_42 = arith.constant 0 : index
    %103 = vector.load %arg8[%c0_41, %c0_42] : memref<128x512xbf16, #tpu.memory_space<vmem>>, vector<128x512xbf16>
    %cst_43 = arith.constant dense<0.000000e+00> : vector<32x512xf32>
    %104 = tpu.matmul %102, %103, %cst_43 {dimension_numbers = #tpu.dot_dimension_numbers<[1], [0], [0], [1], [0, 0, 1, 1], [], []>} : vector<32x128xbf16>, vector<128x512xbf16>, vector<32x512xf32> -> vector<32x512xf32>
    %cst_44 = arith.constant 0.000000e+00 : f32
    %105 = vector.broadcast %cst_44 : f32 to vector<32x512xf32>
    %106 = arith.cmpf oge, %104, %105 : vector<32x512xf32>
    %cst_45 = arith.constant 0.00999999977 : f32
    %107 = vector.broadcast %cst_45 : f32 to vector<32x512xf32>
    %108 = arith.mulf %107, %104 : vector<32x512xf32>
    %109 = arith.select %106, %104, %108 : vector<32x512xi1>, vector<32x512xf32>
    %110 = arith.truncf %109 : vector<32x512xf32> to vector<32x512xbf16>
    %c0_46 = arith.constant 0 : index
    %c0_47 = arith.constant 0 : index
    %111 = vector.load %arg9[%c0_46, %c0_47] : memref<512x128xbf16, #tpu.memory_space<vmem>>, vector<512x128xbf16>
    %cst_48 = arith.constant dense<0.000000e+00> : vector<32x128xf32>
    %112 = tpu.matmul %110, %111, %cst_48 {dimension_numbers = #tpu.dot_dimension_numbers<[1], [0], [0], [1], [0, 0, 1, 1], [], []>} : vector<32x512xbf16>, vector<512x128xbf16>, vector<32x128xf32> -> vector<32x128xf32>
    %113 = arith.addf %70, %112 : vector<32x128xf32>
    %c0_49 = arith.constant 0 : index
    %c0_50 = arith.constant 0 : index
    %114 = vector.load %arg10[%c0_49, %c0_50] : memref<32x128xf32, #tpu.memory_space<vmem>>, vector<32x128xf32>
    tpu.vector_store %arg10[%c0_49, %c0_50], %113 {strides = array<i32>} : memref<32x128xf32, #tpu.memory_space<vmem>>, vector<32x128xf32>,
    return
  }
}

</mosaic_0001>

<llo_original>
// kernel: code_embed_conv_forward.1
$region0: #{code_embed_conv_forward.1}
  #allocation0 [shape = 'u32[]', space=smem, size = 0x4, offset = 0x4, fixed_abs, tag = 'smem constant byte address 0x4 - core index']
  #allocation1 [shape = 'u32[144,128]{1,0:T(1,128)}', space=vmem, size = 0x12000, scoped, tag = 'internal scratch']
  %s0 = inlined_call_operand.vmem [shape: f32[32,128], index: 0, kind: input, shape index: {}]
  %s1 = inlined_call_operand.vmem [shape: f32[2,4], index: 1, kind: input, shape index: {}]
  %s2 = inlined_call_operand.vmem [shape: f32[4,16], index: 2, kind: input, shape index: {}]
  %s3 = inlined_call_operand.vmem [shape: f32[4,8], index: 3, kind: input, shape index: {}]
  %s4 = inlined_call_operand.vmem [shape: f32[128,8], index: 4, kind: input, shape index: {}]
  %s5 = inlined_call_operand.vmem [shape: f32[8,128], index: 5, kind: input, shape index: {}]
  %s6 = inlined_call_operand.vmem [shape: bf16[384,128], index: 6, kind: input, shape index: {}]
  %s7 = inlined_call_operand.vmem [shape: f32[128,8], index: 7, kind: input, shape index: {}]
  %s8 = inlined_call_operand.vmem [shape: bf16[128,512], index: 8, kind: input, shape index: {}]
  %s9 = inlined_call_operand.vmem [shape: bf16[512,128], index: 9, kind: input, shape index: {}]
  %s10 = inlined_call_operand.vmem [shape: f32[32,128], index: 10, kind: output, shape index: {}]
  %s11 = sld [smem:[#allocation0]]
  $region50: #{code_embed_conv_forward.1} parent=0
    _
  %s13 = ssub.s32 1, %s11
  %s14 = scalar_select 0, %s13, %s11
  // Predicated region
  $region2: #{code_embed_conv_forward.1} parent=0 // pred_check
    _
  $region3: #{code_embed_conv_forward.1} parent=0 // pred_check_branch
    %16 = sbr.rel (0) target = $region5
  $region4: #{code_embed_conv_forward.1} parent=0 // pred_region
    _
  $region5: #{code_embed_conv_forward.1} parent=0 // pred_fallthru
    _
  // Predicated region
  $region6: #{code_embed_conv_forward.1} parent=0 // pred_check
    _
  $region7: #{code_embed_conv_forward.1} parent=0 // pred_check_branch
    %18 = sbr.rel (0) target = $region9
  $region8: #{code_embed_conv_forward.1} parent=0 // pred_region
    _
  $region9: #{code_embed_conv_forward.1} parent=0 // pred_fallthru
    _
  // Predicated region
  $region10: #{code_embed_conv_forward.1} parent=0 // pred_check
    _
  $region11: #{code_embed_conv_forward.1} parent=0 // pred_check_branch
    %20 = sbr.rel (0) target = $region13
  $region12: #{code_embed_conv_forward.1} parent=0 // pred_region
    _
  $region13: #{code_embed_conv_forward.1} parent=0 // pred_fallthru
    _
  // Predicated region
  $region14: #{code_embed_conv_forward.1} parent=0 // pred_check
    _
  $region15: #{code_embed_conv_forward.1} parent=0 // pred_check_branch
    %22 = sbr.rel (0) target = $region17
  $region16: #{code_embed_conv_forward.1} parent=0 // pred_region
    _
  $region17: #{code_embed_conv_forward.1} parent=0 // pred_fallthru
    _
  // Predicated region
  $region18: #{code_embed_conv_forward.1} parent=0 // pred_check
    _
  $region19: #{code_embed_conv_forward.1} parent=0 // pred_check_branch
    %24 = sbr.rel (0) target = $region21
  $region20: #{code_embed_conv_forward.1} parent=0 // pred_region
    _
  $region21: #{code_embed_conv_forward.1} parent=0 // pred_fallthru
    _
  // Predicated region
  $region22: #{code_embed_conv_forward.1} parent=0 // pred_check
    _
  $region23: #{code_embed_conv_forward.1} parent=0 // pred_check_branch
    %26 = sbr.rel (0) target = $region25
  $region24: #{code_embed_conv_forward.1} parent=0 // pred_region
    _
  $region25: #{code_embed_conv_forward.1} parent=0 // pred_fallthru
    _
  // Predicated region
  $region26: #{code_embed_conv_forward.1} parent=0 // pred_check
    _
  $region27: #{code_embed_conv_forward.1} parent=0 // pred_check_branch
    %28 = sbr.rel (0) target = $region29
  $region28: #{code_embed_conv_forward.1} parent=0 // pred_region
    _
  $region29: #{code_embed_conv_forward.1} parent=0 // pred_fallthru
    _
  // Predicated region
  $region30: #{code_embed_conv_forward.1} parent=0 // pred_check
    _
  $region31: #{code_embed_conv_forward.1} parent=0 // pred_check_branch
    %30 = sbr.rel (0) target = $region33
  $region32: #{code_embed_conv_forward.1} parent=0 // pred_region
    _
  $region33: #{code_embed_conv_forward.1} parent=0 // pred_fallthru
    _
  // Predicated region
  $region34: #{code_embed_conv_forward.1} parent=0 // pred_check
    _
  $region35: #{code_embed_conv_forward.1} parent=0 // pred_check_branch
    %32 = sbr.rel (0) target = $region37
  $region36: #{code_embed_conv_forward.1} parent=0 // pred_region
    _
  $region37: #{code_embed_conv_forward.1} parent=0 // pred_fallthru
    _
  // Predicated region
  $region38: #{code_embed_conv_forward.1} parent=0 // pred_check
    _
  $region39: #{code_embed_conv_forward.1} parent=0 // pred_check_branch
    %34 = sbr.rel (0) target = $region41
  $region40: #{code_embed_conv_forward.1} parent=0 // pred_region
    _
  $region41: #{code_embed_conv_forward.1} parent=0 // pred_fallthru
    _
  %v36 = vld [vmem:[%s5] sm:$0xff]
  %v37 = vld [vmem:[%s0] sm:$0xff]
  %v38 = vld [vmem:[%s0 + $0x8] sm:$0xff]
  %v39 = vld [vmem:[%s0 + $0x10] sm:$0xff]
  %v40 = vld [vmem:[%s0 + $0x18] sm:$0xff]
  %v41 = vld [vmem:[%s1] sm:$0x3]
  %v42 = vld [vmem:[%s2] sm:$0xf]
  %vm43 = vcmask 31744
  %v45 = vsel %vm43, %v41, 0
  %vm47 = vcmask 1043456
  %v49 = vsel %vm47, %v42, 0
  %51 = vmatprep.subr.mxu0 0.0
  %52 = vmatpush1.msra.mxu0 %v49
  %53 = vmatprep.subr.mxu0 0.0
  %54 = vmatpush1.msra.mxu0 0.0
  %55 = vmatprep.subr.mxu0 0.0
  %56 = vmatpush1.msra.mxu0 0.0
  %57 = vmatprep.subr.mxu0 0.0
  %58 = vmatpush1.msra.mxu0 0.0
  %59 = vmatprep.subr.mxu0 0.0
  %60 = vmatpush1.msra.mxu0 0.0
  %61 = vmatprep.subr.mxu0 0.0
  %62 = vmatpush1.msra.mxu0 0.0
  %63 = vmatprep.subr.mxu0 0.0
  %64 = vmatpush1.msra.mxu0 0.0
  %65 = vmatprep.subr.mxu0 0.0
  %66 = vmatpush1.msra.mxu0 0.0
  %67 = vmatprep.subr.mxu0 0.0
  %68 = vmatpush1.msra.mxu0 0.0
  %69 = vmatprep.subr.mxu0 0.0
  %70 = vmatpush1.msra.mxu0 0.0
  %71 = vmatprep.subr.mxu0 0.0
  %72 = vmatpush1.msra.mxu0 0.0
  %73 = vmatprep.subr.mxu0 0.0
  %74 = vmatpush1.msra.mxu0 0.0
  %75 = vmatprep.subr.mxu0 0.0
  %76 = vmatpush1.msra.mxu0 0.0
  %77 = vmatprep.subr.mxu0 0.0
  %78 = vmatpush1.msra.mxu0 0.0
  %79 = vmatprep.subr.mxu0 0.0
  %80 = vmatpush1.msra.mxu0 0.0
  %81 = vmatprep.subr.mxu0 0.0
  %82 = vmatpush1.msra.mxu0 0.0
  %83 = vmatprep.subr.mxu0 0.0
  %84 = vmatpush1.msra.mxu0 0.0
  %85 = vmatprep.subr.mxu0 0.0
  %86 = vmatpush1.msra.mxu0 0.0
  %87 = vmatprep.subr.mxu0 0.0
  %88 = vmatpush1.msra.mxu0 0.0
  %89 = vmatprep.subr.mxu0 0.0
  %90 = vmatpush1.msra.mxu0 0.0
  %91 = vmatprep.subr.mxu0 0.0
  %92 = vmatpush1.msra.mxu0 0.0
  %93 = vmatprep.subr.mxu0 0.0
  %94 = vmatpush1.msra.mxu0 0.0
  %95 = vmatprep.subr.mxu0 0.0
  %96 = vmatpush1.msra.mxu0 0.0
  %97 = vmatprep.subr.mxu0 0.0
  %98 = vmatpush1.msra.mxu0 0.0
  %99 = vmatprep.subr.mxu0 0.0
  %100 = vmatpush1.msra.mxu0 0.0
  %101 = vmatprep.subr.mxu0 0.0
  %102 = vmatpush1.msra.mxu0 0.0
  %103 = vmatprep.subr.mxu0 0.0
  %104 = vmatpush1.msra.mxu0 0.0
  %105 = vmatprep.subr.mxu0 0.0
  %106 = vmatpush1.msra.mxu0 0.0
  %107 = vmatprep.subr.mxu0 0.0
  %108 = vmatpush1.msra.mxu0 0.0
  %109 = vmatprep.subr.mxu0 0.0
  %110 = vmatpush1.msra.mxu0 0.0
  %111 = vmatprep.subr.mxu0 0.0
  %112 = vmatpush1.msra.mxu0 0.0
  %113 = vmatprep.subr.mxu0 0.0
  %114 = vmatpush1.msra.mxu0 0.0
  %115 = vmatprep.mubr.f32.mxu0 0.0
  %116 = vmatmul.mubr.f32.gmra.mrb[0].mxu0 %v45
  %v117 = vpop.f32.mrb[0].mxu0
  %v118 = vadd.f32 0.0, %v117
  %v119 = vpop.f32.mrb[0].mxu0
  %120 = vdwg.mxu0
  %v121 = vld [vmem:[%s3] sm:$0x1]
  %v122 = vld [vmem:[%s3 + $0x1] sm:$0x1]
  %v123 = vadd.f32 %v37, %v38
  %v124 = vadd.f32 %v123, %v39
  %v125 = vadd.f32 %v124, %v40
  %v126 = vrot.slane %v125, 4
  %v127 = vadd.f32 %v125, %v126
  %v128 = vrot.slane %v127, 2
  %v129 = vadd.f32 %v127, %v128
  %v130 = vrot.slane %v129, 1
  %v131 = vadd.f32 %v129, %v130
  %v132 = vmul.f32 %v37, %v37
  %v133 = vmul.f32 %v38, %v38
  %v134 = vmul.f32 %v39, %v39
  %v135 = vmul.f32 %v40, %v40
  %v136 = vadd.f32 %v132, %v133
  %v137 = vadd.f32 %v136, %v134
  %v138 = vadd.f32 %v137, %v135
  %v139 = vrot.slane %v138, 4
  %v140 = vadd.f32 %v138, %v139
  %v141 = vrot.slane %v140, 2
  %v142 = vadd.f32 %v140, %v141
  %v143 = vrot.slane %v142, 1
  %v144 = vadd.f32 %v142, %v143
  %vm145 = vcmask 1040384
  %v146 = vsel %vm145, %v131, %v144
  %v147 = vld [vmem:[%s4] sm:$0xff]
  %v148 = vld [vmem:[%s4 + $0x8] sm:$0xff]
  %v149 = vld [vmem:[%s4 + $0x10] sm:$0xff]
  %v150 = vld [vmem:[%s4 + $0x18] sm:$0xff]
  %v151 = vld [vmem:[%s4 + $0x20] sm:$0xff]
  %v152 = vld [vmem:[%s4 + $0x28] sm:$0xff]
  %v153 = vld [vmem:[%s4 + $0x30] sm:$0xff]
  %v154 = vld [vmem:[%s4 + $0x38] sm:$0xff]
  %v155 = vld [vmem:[%s4 + $0x40] sm:$0xff]
  %v156 = vld [vmem:[%s4 + $0x48] sm:$0xff]
  %v157 = vld [vmem:[%s4 + $0x50] sm:$0xff]
  %v158 = vld [vmem:[%s4 + $0x58] sm:$0xff]
  %v159 = vld [vmem:[%s4 + $0x60] sm:$0xff]
  %v160 = vld [vmem:[%s4 + $0x68] sm:$0xff]
  %v161 = vld [vmem:[%s4 + $0x70] sm:$0xff]
  %v162 = vld [vmem:[%s4 + $0x78] sm:$0xff]
  %163 = vmatprep.subr.mxu0 0.0
  %164 = vmatpush1.msra.mxu0 %v147
  %165 = vmatprep.subr.mxu0 0.0
  %166 = vmatpush1.msra.mxu0 %v148
  %167 = vmatprep.subr.mxu0 0.0
  %168 = vmatpush1.msra.mxu0 %v149
  %169 = vmatprep.subr.mxu0 0.0
  %170 = vmatpush1.msra.mxu0 %v150
  %171 = vmatprep.subr.mxu0 0.0
  %172 = vmatpush1.msra.mxu0 %v151
  %173 = vmatprep.subr.mxu0 0.0
  %174 = vmatpush1.msra.mxu0 %v152
  %175 = vmatprep.subr.mxu0 0.0
  %176 = vmatpush1.msra.mxu0 %v153
  %177 = vmatprep.subr.mxu0 0.0
  %178 = vmatpush1.msra.mxu0 %v154
  %179 = vmatprep.subr.mxu0 0.0
  %180 = vmatpush1.msra.mxu0 %v155
  %181 = vmatprep.subr.mxu0 0.0
  %182 = vmatpush1.msra.mxu0 %v156
  %183 = vmatprep.subr.mxu0 0.0
  %184 = vmatpush1.msra.mxu0 %v157
  %185 = vmatprep.subr.mxu0 0.0
  %186 = vmatpush1.msra.mxu0 %v158
  %187 = vmatprep.subr.mxu0 0.0
  %188 = vmatpush1.msra.mxu0 %v159
  %189 = vmatprep.subr.mxu0 0.0
  %190 = vmatpush1.msra.mxu0 %v160
  %191 = vmatprep.subr.mxu0 0.0
  %192 = vmatpush1.msra.mxu0 %v161
  %193 = vmatprep.subr.mxu0 0.0
  %194 = vmatpush1.msra.mxu0 %v162
  %195 = vmatprep.subr.mxu0 0.0
  %196 = vmatpush1.msra.mxu0 0.0
  %197 = vmatprep.subr.mxu0 0.0
  %198 = vmatpush1.msra.mxu0 0.0
  %199 = vmatprep.subr.mxu0 0.0
  %200 = vmatpush1.msra.mxu0 0.0
  %201 = vmatprep.subr.mxu0 0.0
  %202 = vmatpush1.msra.mxu0 0.0
  %203 = vmatprep.subr.mxu0 0.0
  %204 = vmatpush1.msra.mxu0 0.0
  %205 = vmatprep.subr.mxu0 0.0
  %206 = vmatpush1.msra.mxu0 0.0
  %207 = vmatprep.subr.mxu0 0.0
  %208 = vmatpush1.msra.mxu0 0.0
  %209 = vmatprep.subr.mxu0 0.0
  %210 = vmatpush1.msra.mxu0 0.0
  %211 = vmatprep.subr.mxu0 0.0
  %212 = vmatpush1.msra.mxu0 0.0
  %213 = vmatprep.subr.mxu0 0.0
  %214 = vmatpush1.msra.mxu0 0.0
  %215 = vmatprep.subr.mxu0 0.0
  %216 = vmatpush1.msra.mxu0 0.0
  %217 = vmatprep.subr.mxu0 0.0
  %218 = vmatpush1.msra.mxu0 0.0
  %219 = vmatprep.subr.mxu0 0.0
  %220 = vmatpush1.msra.mxu0 0.0
  %221 = vmatprep.subr.mxu0 0.0
  %222 = vmatpush1.msra.mxu0 0.0
  %223 = vmatprep.subr.mxu0 0.0
  %224 = vmatpush1.msra.mxu0 0.0
  %225 = vmatprep.subr.mxu0 0.0
  %226 = vmatpush1.msra.mxu0 0.0
  %227 = vmatprep.mubr.f32.mxu0 0.0
  %228 = vmatmul.mubr.f32.gmra.mrb[0].mxu0 %v146
  %v229 = vpop.f32.mrb[0].mxu0
  %v230 = vadd.f32 0.0, %v229
  %v231 = vpop.f32.mrb[0].mxu0
  %232 = vdwg.mxu0
  %v233 = vmul.f32 %v230, %v230
  %v235 = vrot.slane %v233, 7
  %v237 = vsub.f32 %v230, %v235
  %v238 = vadd.f32 %v237, 1e-05
  %v239 = vrsqrt.pop %v238
  %v241 = vrot.slane %v239, 1
  %v243 = vmul.f32 %v121, %v241
  %v244 = vmul.f32 %v230, %v243
  %v245 = vsub.f32 %v122, %v244
  %vm246 = vcmask 64512
  %v248 = vsel %vm246, %v243, 0
  %250 = vmatprep.subr.mxu0 0.0
  %251 = vmatpush1.msra.mxu0 %v36
  %252 = vmatprep.subr.mxu0 0.0
  %253 = vmatpush1.msra.mxu0 0.0
  %254 = vmatprep.subr.mxu0 0.0
  %255 = vmatpush1.msra.mxu0 0.0
  %256 = vmatprep.subr.mxu0 0.0
  %257 = vmatpush1.msra.mxu0 0.0
  %258 = vmatprep.subr.mxu0 0.0
  %259 = vmatpush1.msra.mxu0 0.0
  %260 = vmatprep.subr.mxu0 0.0
  %261 = vmatpush1.msra.mxu0 0.0
  %262 = vmatprep.subr.mxu0 0.0
  %263 = vmatpush1.msra.mxu0 0.0
  %264 = vmatprep.subr.mxu0 0.0
  %265 = vmatpush1.msra.mxu0 0.0
  %266 = vmatprep.subr.mxu0 0.0
  %267 = vmatpush1.msra.mxu0 0.0
  %268 = vmatprep.subr.mxu0 0.0
  %269 = vmatpush1.msra.mxu0 0.0
  %270 = vmatprep.subr.mxu0 0.0
  %271 = vmatpush1.msra.mxu0 0.0
  %272 = vmatprep.subr.mxu0 0.0
  %273 = vmatpush1.msra.mxu0 0.0
  %274 = vmatprep.subr.mxu0 0.0
  %275 = vmatpush1.msra.mxu0 0.0
  %276 = vmatprep.subr.mxu0 0.0
  %277 = vmatpush1.msra.mxu0 0.0
  %278 = vmatprep.subr.mxu0 0.0
  %279 = vmatpush1.msra.mxu0 0.0
  %280 = vmatprep.subr.mxu0 0.0
  %281 = vmatpush1.msra.mxu0 0.0
  %282 = vmatprep.subr.mxu0 0.0
  %283 = vmatpush1.msra.mxu0 0.0
  %284 = vmatprep.subr.mxu0 0.0
  %285 = vmatpush1.msra.mxu0 0.0
  %286 = vmatprep.subr.mxu0 0.0
  %287 = vmatpush1.msra.mxu0 0.0
  %288 = vmatprep.subr.mxu0 0.0
  %289 = vmatpush1.msra.mxu0 0.0
  %290 = vmatprep.subr.mxu0 0.0
  %291 = vmatpush1.msra.mxu0 0.0
  %292 = vmatprep.subr.mxu0 0.0
  %293 = vmatpush1.msra.mxu0 0.0
  %294 = vmatprep.subr.mxu0 0.0
  %295 = vmatpush1.msra.mxu0 0.0
  %296 = vmatprep.subr.mxu0 0.0
  %297 = vmatpush1.msra.mxu0 0.0
  %298 = vmatprep.subr.mxu0 0.0
  %299 = vmatpush1.msra.mxu0 0.0
  %300 = vmatprep.subr.mxu0 0.0
  %301 = vmatpush1.msra.mxu0 0.0
  %302 = vmatprep.subr.mxu0 0.0
  %303 = vmatpush1.msra.mxu0 0.0
  %304 = vmatprep.subr.mxu0 0.0
  %305 = vmatpush1.msra.mxu0 0.0
  %306 = vmatprep.subr.mxu0 0.0
  %307 = vmatpush1.msra.mxu0 0.0
  %308 = vmatprep.subr.mxu0 0.0
  %309 = vmatpush1.msra.mxu0 0.0
  %310 = vmatprep.subr.mxu0 0.0
  %311 = vmatpush1.msra.mxu0 0.0
  %312 = vmatprep.subr.mxu0 0.0
  %313 = vmatpush1.msra.mxu0 0.0
  %314 = vmatprep.mubr.f32.mxu0 0.0
  %315 = vmatmul.mubr.f32.gmra.mrb[0].mxu0 %v248
  %v316 = vpop.f32.mrb[0].mxu0
  %v317 = vadd.f32 0.0, %v316
  %v318 = vpop.f32.mrb[0].mxu0
  %319 = vdwg.mxu0
  %v320 = vlaneseq
  %v321 = vshrl.u32 %v320, 7
  %v322 = vsub.s32 0, %v321
  %v323 = vrot.slane %v245, %v322
  %v324 = vadd.f32 %v118, %v323
  %v326 = vsel %vm246, %v324, 0
  %328 = vmatprep.subr.mxu0 0.0
  %329 = vmatpush1.msra.mxu0 %v36
  %330 = vmatprep.subr.mxu0 0.0
  %331 = vmatpush1.msra.mxu0 0.0
  %332 = vmatprep.subr.mxu0 0.0
  %333 = vmatpush1.msra.mxu0 0.0
  %334 = vmatprep.subr.mxu0 0.0
  %335 = vmatpush1.msra.mxu0 0.0
  %336 = vmatprep.subr.mxu0 0.0
  %337 = vmatpush1.msra.mxu0 0.0
  %338 = vmatprep.subr.mxu0 0.0
  %339 = vmatpush1.msra.mxu0 0.0
  %340 = vmatprep.subr.mxu0 0.0
  %341 = vmatpush1.msra.mxu0 0.0
  %342 = vmatprep.subr.mxu0 0.0
  %343 = vmatpush1.msra.mxu0 0.0
  %344 = vmatprep.subr.mxu0 0.0
  %345 = vmatpush1.msra.mxu0 0.0
  %346 = vmatprep.subr.mxu0 0.0
  %347 = vmatpush1.msra.mxu0 0.0
  %348 = vmatprep.subr.mxu0 0.0
  %349 = vmatpush1.msra.mxu0 0.0
  %350 = vmatprep.subr.mxu0 0.0
  %351 = vmatpush1.msra.mxu0 0.0
  %352 = vmatprep.subr.mxu0 0.0
  %353 = vmatpush1.msra.mxu0 0.0
  %354 = vmatprep.subr.mxu0 0.0
  %355 = vmatpush1.msra.mxu0 0.0
  %356 = vmatprep.subr.mxu0 0.0
  %357 = vmatpush1.msra.mxu0 0.0
  %358 = vmatprep.subr.mxu0 0.0
  %359 = vmatpush1.msra.mxu0 0.0
  %360 = vmatprep.subr.mxu0 0.0
  %361 = vmatpush1.msra.mxu0 0.0
  %362 = vmatprep.subr.mxu0 0.0
  %363 = vmatpush1.msra.mxu0 0.0
  %364 = vmatprep.subr.mxu0 0.0
  %365 = vmatpush1.msra.mxu0 0.0
  %366 = vmatprep.subr.mxu0 0.0
  %367 = vmatpush1.msra.mxu0 0.0
  %368 = vmatprep.subr.mxu0 0.0
  %369 = vmatpush1.msra.mxu0 0.0
  %370 = vmatprep.subr.mxu0 0.0
  %371 = vmatpush1.msra.mxu0 0.0
  %372 = vmatprep.subr.mxu0 0.0
  %373 = vmatpush1.msra.mxu0 0.0
  %374 = vmatprep.subr.mxu0 0.0
  %375 = vmatpush1.msra.mxu0 0.0
  %376 = vmatprep.subr.mxu0 0.0
  %377 = vmatpush1.msra.mxu0 0.0
  %378 = vmatprep.subr.mxu0 0.0
  %379 = vmatpush1.msra.mxu0 0.0
  %380 = vmatprep.subr.mxu0 0.0
  %381 = vmatpush1.msra.mxu0 0.0
  %382 = vmatprep.subr.mxu0 0.0
  %383 = vmatpush1.msra.mxu0 0.0
  %384 = vmatprep.subr.mxu0 0.0
  %385 = vmatpush1.msra.mxu0 0.0
  %386 = vmatprep.subr.mxu0 0.0
  %387 = vmatpush1.msra.mxu0 0.0
  %388 = vmatprep.subr.mxu0 0.0
  %389 = vmatpush1.msra.mxu0 0.0
  %390 = vmatprep.subr.mxu0 0.0
  %391 = vmatpush1.msra.mxu0 0.0
  %392 = vmatprep.mubr.f32.mxu0 0.0
  %393 = vmatmul.mubr.f32.gmra.mrb[0].mxu0 %v326
  %v394 = vpop.f32.mrb[0].mxu0
  %v395 = vadd.f32 0.0, %v394
  %v396 = vpop.f32.mrb[0].mxu0
  %397 = vdwg.mxu0
  %v398 = vlaneseq
  %v399 = vshrl.u32 %v398, 7
  %v400 = vsub.s32 0, %v399
  %v401 = vrot.slane %v317, %v400
  %v402 = vmul.f32 %v37, %v401
  %v403 = vmul.f32 %v38, %v401
  %v404 = vmul.f32 %v39, %v401
  %v405 = vmul.f32 %v40, %v401
  %v408 = vunpack.c.l.s4 1966171168
  %v409 = vunpack.c.0.s8 %v408
  %v410 = vlaneseq
  %v411 = vshrl.u32 %v410, 7
  %v412 = vsub.s32 %v409, %v411
  %v413 = vrot.slane %v395, %v412
  %v414 = vcombine.high %v413, %v413
  %v416 = vunpack.c.l.s4 1966171168
  %v417 = vunpack.c.0.s8 %v416
  %v418 = vlaneseq
  %v419 = vshrl.u32 %v418, 7
  %v420 = vsub.s32 %v417, %v419
  %v421 = vrot.slane %v413, %v420
  %v423 = vunpack.c.l.s4 1966171168
  %v424 = vunpack.c.0.s8 %v423
  %v425 = vlaneseq
  %v426 = vshrl.u32 %v425, 7
  %v427 = vsub.s32 %v424, %v426
  %v428 = vrot.slane %v414, %v427
  %v429 = vlaneseq
  %v430 = vshrl.u32 %v429, 7
  %v431 = vsub.s32 0, %v430
  %v432 = vrot.slane %v421, %v431
  %v433 = vlaneseq
  %v434 = vshrl.u32 %v433, 7
  %v435 = vsub.s32 0, %v434
  %v436 = vrot.slane %v428, %v435
  %v439 = vadd.f32 %v402, %v432
  %v440 = vadd.f32 %v403, %v432
  %v441 = vadd.f32 %v404, %v436
  %v442 = vadd.f32 %v405, %v436
  %v447 = vrot.slane %v439, 7
  %v448 = vrot.slane %v440, 7
  %v449 = vsel %vm145, %v447, %v448
  %v450 = vrot.slane %v441, 7
  %v451 = vrot.slane %v442, 7
  %v452 = vsel %vm145, %v450, %v451
  %v457 = vsel %vm145, 0.0, %v447
  %v458 = vsel %vm145, 0.0, %v450
  %vm459 = vcmask 1046528
  %v460 = vrot.slane %v439, 1
  %v461 = vrot.slane %v440, 1
  %v462 = vsel %vm459, %v460, %v461
  %v463 = vrot.slane %v441, 1
  %v464 = vrot.slane %v442, 1
  %v465 = vsel %vm459, %v463, %v464
  %v470 = vsel %vm459, %v461, 0.0
  %v471 = vsel %vm459, %v464, 0.0
  %v472 = vpack.c.bf16 %v449, %v457
  %v473 = vpack.c.bf16 %v440, %v439
  %v474 = vpack.c.bf16 %v470, %v462
  %v475 = vpack.c.bf16 %v452, %v458
  %v476 = vpack.c.bf16 %v442, %v441
  %v477 = vpack.c.bf16 %v471, %v465
  %v478 = vld [vmem:[%s6] sm:$0xf]
  %v479 = vld [vmem:[%s6 + $0x4] sm:$0xf]
  %v480 = vld [vmem:[%s6 + $0x8] sm:$0xf]
  %v481 = vld [vmem:[%s6 + $0xc] sm:$0xf]
  %v482 = vld [vmem:[%s6 + $0x10] sm:$0xf]
  %v483 = vld [vmem:[%s6 + $0x14] sm:$0xf]
  %v484 = vld [vmem:[%s6 + $0x18] sm:$0xf]
  %v485 = vld [vmem:[%s6 + $0x1c] sm:$0xf]
  %v486 = vld [vmem:[%s6 + $0x20] sm:$0xf]
  %v487 = vld [vmem:[%s6 + $0x24] sm:$0xf]
  %v488 = vld [vmem:[%s6 + $0x28] sm:$0xf]
  %v489 = vld [vmem:[%s6 + $0x2c] sm:$0xf]
  %v490 = vld [vmem:[%s6 + $0x30] sm:$0xf]
  %v491 = vld [vmem:[%s6 + $0x34] sm:$0xf]
  %v492 = vld [vmem:[%s6 + $0x38] sm:$0xf]
  %v493 = vld [vmem:[%s6 + $0x3c] sm:$0xf]
  %v494 = vld [vmem:[%s6 + $0x40] sm:$0xf]
  %v495 = vld [vmem:[%s6 + $0x44] sm:$0xf]
  %v496 = vld [vmem:[%s6 + $0x48] sm:$0xf]
  %v497 = vld [vmem:[%s6 + $0x4c] sm:$0xf]
  %v498 = vld [vmem:[%s6 + $0x50] sm:$0xf]
  %v499 = vld [vmem:[%s6 + $0x54] sm:$0xf]
  %v500 = vld [vmem:[%s6 + $0x58] sm:$0xf]
  %v501 = vld [vmem:[%s6 + $0x5c] sm:$0xf]
  %v502 = vld [vmem:[%s6 + $0x60] sm:$0xf]
  %v503 = vld [vmem:[%s6 + $0x64] sm:$0xf]
  %v504 = vld [vmem:[%s6 + $0x68] sm:$0xf]
  %v505 = vld [vmem:[%s6 + $0x6c] sm:$0xf]
  %v506 = vld [vmem:[%s6 + $0x70] sm:$0xf]
  %v507 = vld [vmem:[%s6 + $0x74] sm:$0xf]
  %v508 = vld [vmem:[%s6 + $0x78] sm:$0xf]
  %v509 = vld [vmem:[%s6 + $0x7c] sm:$0xf]
  %v510 = vld [vmem:[%s6 + $0x80] sm:$0xf]
  %v511 = vld [vmem:[%s6 + $0x84] sm:$0xf]
  %v512 = vld [vmem:[%s6 + $0x88] sm:$0xf]
  %v513 = vld [vmem:[%s6 + $0x8c] sm:$0xf]
  %v514 = vld [vmem:[%s6 + $0x90] sm:$0xf]
  %v515 = vld [vmem:[%s6 + $0x94] sm:$0xf]
  %v516 = vld [vmem:[%s6 + $0x98] sm:$0xf]
  %v517 = vld [vmem:[%s6 + $0x9c] sm:$0xf]
  %v518 = vld [vmem:[%s6 + $0xa0] sm:$0xf]
  %v519 = vld [vmem:[%s6 + $0xa4] sm:$0xf]
  %v520 = vld [vmem:[%s6 + $0xa8] sm:$0xf]
  %v521 = vld [vmem:[%s6 + $0xac] sm:$0xf]
  %v522 = vld [vmem:[%s6 + $0xb0] sm:$0xf]
  %v523 = vld [vmem:[%s6 + $0xb4] sm:$0xf]
  %v524 = vld [vmem:[%s6 + $0xb8] sm:$0xf]
  %v525 = vld [vmem:[%s6 + $0xbc] sm:$0xf]
  %v574 = vunpack.c.l.b16 %v478
  %v575 = vunpack.c.l.b16 %v479
  %v576 = vunpack.c.l.b16 %v480
  %v577 = vunpack.c.l.b16 %v481
  %v578 = vunpack.c.l.b16 %v482
  %v579 = vunpack.c.l.b16 %v483
  %v580 = vunpack.c.l.b16 %v484
  %v581 = vunpack.c.l.b16 %v485
  %v582 = vunpack.c.l.b16 %v486
  %v583 = vunpack.c.l.b16 %v487
  %v584 = vunpack.c.l.b16 %v488
  %v585 = vunpack.c.l.b16 %v489
  %v586 = vunpack.c.l.b16 %v490
  %v587 = vunpack.c.l.b16 %v491
  %v588 = vunpack.c.l.b16 %v492
  %v589 = vunpack.c.l.b16 %v493
  %v590 = vunpack.c.l.b16 %v494
  %v591 = vunpack.c.l.b16 %v495
  %v592 = vunpack.c.l.b16 %v496
  %v593 = vunpack.c.l.b16 %v497
  %v594 = vunpack.c.l.b16 %v498
  %v595 = vunpack.c.l.b16 %v499
  %v596 = vunpack.c.l.b16 %v500
  %v597 = vunpack.c.l.b16 %v501
  %v598 = vunpack.c.l.b16 %v502
  %v599 = vunpack.c.l.b16 %v503
  %v600 = vunpack.c.l.b16 %v504
  %v601 = vunpack.c.l.b16 %v505
  %v602 = vunpack.c.l.b16 %v506
  %v603 = vunpack.c.l.b16 %v507
  %v604 = vunpack.c.l.b16 %v508
  %v605 = vunpack.c.l.b16 %v509
  %v606 = vunpack.c.l.b16 %v510
  %v607 = vunpack.c.l.b16 %v511
  %v608 = vunpack.c.l.b16 %v512
  %v609 = vunpack.c.l.b16 %v513
  %v610 = vunpack.c.l.b16 %v514
  %v611 = vunpack.c.l.b16 %v515
  %v612 = vunpack.c.l.b16 %v516
  %v613 = vunpack.c.l.b16 %v517
  %v614 = vunpack.c.l.b16 %v518
  %v615 = vunpack.c.l.b16 %v519
  %v616 = vunpack.c.l.b16 %v520
  %v617 = vunpack.c.l.b16 %v521
  %v618 = vunpack.c.l.b16 %v522
  %v619 = vunpack.c.l.b16 %v523
  %v620 = vunpack.c.l.b16 %v524
  %v621 = vunpack.c.l.b16 %v525
  %v622 = vpack.c.b16 %v575, %v574
  %v623 = vpack.c.b16 %v577, %v576
  %v624 = vpack.c.b16 %v579, %v578
  %v625 = vpack.c.b16 %v581, %v580
  %v626 = vpack.c.b16 %v583, %v582
  %v627 = vpack.c.b16 %v585, %v584
  %v628 = vpack.c.b16 %v587, %v586
  %v629 = vpack.c.b16 %v589, %v588
  %v630 = vpack.c.b16 %v591, %v590
  %v631 = vpack.c.b16 %v593, %v592
  %v632 = vpack.c.b16 %v595, %v594
  %v633 = vpack.c.b16 %v597, %v596
  %v634 = vpack.c.b16 %v599, %v598
  %v635 = vpack.c.b16 %v601, %v600
  %v636 = vpack.c.b16 %v603, %v602
  %v637 = vpack.c.b16 %v605, %v604
  %v638 = vpack.c.b16 %v607, %v606
  %v639 = vpack.c.b16 %v609, %v608
  %v640 = vpack.c.b16 %v611, %v610
  %v641 = vpack.c.b16 %v613, %v612
  %v642 = vpack.c.b16 %v615, %v614
  %v643 = vpack.c.b16 %v617, %v616
  %v644 = vpack.c.b16 %v619, %v618
  %v645 = vpack.c.b16 %v621, %v620
  %670 = vmatprep.subr.bf16.mxu0 0
  %671 = vmatpush1.bf16.msra.mxu0 %v622
  %672 = vmatprep.subr.bf16.mxu0 0
  %673 = vmatpush1.bf16.msra.mxu0 %v623
  %674 = vmatprep.subr.bf16.mxu0 0
  %675 = vmatpush1.bf16.msra.mxu0 %v624
  %676 = vmatprep.subr.bf16.mxu0 0
  %677 = vmatpush1.bf16.msra.mxu0 %v625
  %678 = vmatprep.subr.bf16.mxu0 0
  %679 = vmatpush1.bf16.msra.mxu0 %v626
  %680 = vmatprep.subr.bf16.mxu0 0
  %681 = vmatpush1.bf16.msra.mxu0 %v627
  %682 = vmatprep.subr.bf16.mxu0 0
  %683 = vmatpush1.bf16.msra.mxu0 %v628
  %684 = vmatprep.subr.bf16.mxu0 0
  %685 = vmatpush1.bf16.msra.mxu0 %v629
  %686 = vmatprep.subr.bf16.mxu0 0
  %687 = vmatpush1.bf16.msra.mxu0 %v630
  %688 = vmatprep.subr.bf16.mxu0 0
  %689 = vmatpush1.bf16.msra.mxu0 %v631
  %690 = vmatprep.subr.bf16.mxu0 0
  %691 = vmatpush1.bf16.msra.mxu0 %v632
  %692 = vmatprep.subr.bf16.mxu0 0
  %693 = vmatpush1.bf16.msra.mxu0 %v633
  %694 = vmatprep.subr.bf16.mxu0 0
  %695 = vmatpush1.bf16.msra.mxu0 %v634
  %696 = vmatprep.subr.bf16.mxu0 0
  %697 = vmatpush1.bf16.msra.mxu0 %v635
  %698 = vmatprep.subr.bf16.mxu0 0
  %699 = vmatpush1.bf16.msra.mxu0 %v636
  %700 = vmatprep.subr.bf16.mxu0 0
  %701 = vmatpush1.bf16.msra.mxu0 %v637
  %702 = vmatprep.mubr.bf16.mxu0 %v473
  %703 = vmatmul.mubr.bf16.gmra.mrb[0].mxu0 %v472
  %v704 = vpop.f32.mrb[0].mxu0
  %v705 = vadd.f32 0.0, %v704
  %v706 = vpop.f32.mrb[0].mxu0
  %v707 = vpop.f32.mrb[0].mxu0
  %v708 = vadd.f32 0.0, %v707
  %v709 = vpop.f32.mrb[0].mxu0
  %710 = vmatprep.mubr.bf16.mxu0 %v476
  %711 = vmatmul.mubr.bf16.gmra.mrb[0].mxu0 %v475
  %v712 = vpop.f32.mrb[0].mxu0
  %v713 = vadd.f32 0.0, %v712
  %v714 = vpop.f32.mrb[0].mxu0
  %v715 = vpop.f32.mrb[0].mxu0
  %v716 = vadd.f32 0.0, %v715
  %v717 = vpop.f32.mrb[0].mxu0
  %718 = vdwg.mxu0
  %719 = vmatprep.subr.bf16.mxu0 0
  %720 = vmatpush1.bf16.msra.mxu0 %v638
  %721 = vmatprep.subr.bf16.mxu0 0
  %722 = vmatpush1.bf16.msra.mxu0 %v639
  %723 = vmatprep.subr.bf16.mxu0 0
  %724 = vmatpush1.bf16.msra.mxu0 %v640
  %725 = vmatprep.subr.bf16.mxu0 0
  %726 = vmatpush1.bf16.msra.mxu0 %v641
  %727 = vmatprep.subr.bf16.mxu0 0
  %728 = vmatpush1.bf16.msra.mxu0 %v642
  %729 = vmatprep.subr.bf16.mxu0 0
  %730 = vmatpush1.bf16.msra.mxu0 %v643
  %731 = vmatprep.subr.bf16.mxu0 0
  %732 = vmatpush1.bf16.msra.mxu0 %v644
  %733 = vmatprep.subr.bf16.mxu0 0
  %734 = vmatpush1.bf16.msra.mxu0 %v645
  %735 = vmatprep.subr.bf16.mxu0 0
  %736 = vmatpush1.bf16.msra.mxu0 0
  %737 = vmatprep.subr.bf16.mxu0 0
  %738 = vmatpush1.bf16.msra.mxu0 0
  %739 = vmatprep.subr.bf16.mxu0 0
  %740 = vmatpush1.bf16.msra.mxu0 0
  %741 = vmatprep.subr.bf16.mxu0 0
  %742 = vmatpush1.bf16.msra.mxu0 0
  %743 = vmatprep.subr.bf16.mxu0 0
  %744 = vmatpush1.bf16.msra.mxu0 0
  %745 = vmatprep.subr.bf16.mxu0 0
  %746 = vmatpush1.bf16.msra.mxu0 0
  %747 = vmatprep.subr.bf16.mxu0 0
  %748 = vmatpush1.bf16.msra.mxu0 0
  %749 = vmatprep.subr.bf16.mxu0 0
  %750 = vmatpush1.bf16.msra.mxu0 0
  %751 = vmatprep.mubr.bf16.mxu0 0
  %752 = vmatmul.mubr.bf16.gmra.mrb[0].mxu0 %v474
  %v753 = vpop.f32.mrb[0].mxu0
  %v754 = vadd.f32 %v705, %v753
  %v755 = vpop.f32.mrb[0].mxu0
  %v756 = vpop.f32.mrb[0].mxu0
  %v757 = vadd.f32 %v708, %v756
  %v758 = vpop.f32.mrb[0].mxu0
  %759 = vmatprep.mubr.bf16.mxu0 0
  %760 = vmatmul.mubr.bf16.gmra.mrb[0].mxu0 %v477
  %v761 = vpop.f32.mrb[0].mxu0
  %v762 = vadd.f32 %v713, %v761
  %v763 = vpop.f32.mrb[0].mxu0
  %v764 = vpop.f32.mrb[0].mxu0
  %v765 = vadd.f32 %v716, %v764
  %v766 = vpop.f32.mrb[0].mxu0
  %767 = vdwg.mxu0
  %v768 = vadd.f32 %v754, %v757
  %v769 = vrot.slane %v768, 4
  %v770 = vadd.f32 %v768, %v769
  %v771 = vrot.slane %v770, 2
  %v772 = vadd.f32 %v770, %v771
  %v773 = vrot.slane %v772, 1
  %v774 = vadd.f32 %v772, %v773
  %v775 = vadd.f32 %v762, %v765
  %v776 = vrot.slane %v775, 4
  %v777 = vadd.f32 %v775, %v776
  %v778 = vrot.slane %v777, 2
  %v779 = vadd.f32 %v777, %v778
  %v780 = vrot.slane %v779, 1
  %v781 = vadd.f32 %v779, %v780
  %v782 = vld [vmem:[%s7] sm:$0xff]
  %v783 = vld [vmem:[%s7 + $0x8] sm:$0xff]
  %v784 = vld [vmem:[%s7 + $0x10] sm:$0xff]
  %v785 = vld [vmem:[%s7 + $0x18] sm:$0xff]
  %v786 = vld [vmem:[%s7 + $0x20] sm:$0xff]
  %v787 = vld [vmem:[%s7 + $0x28] sm:$0xff]
  %v788 = vld [vmem:[%s7 + $0x30] sm:$0xff]
  %v789 = vld [vmem:[%s7 + $0x38] sm:$0xff]
  %v790 = vld [vmem:[%s7 + $0x40] sm:$0xff]
  %v791 = vld [vmem:[%s7 + $0x48] sm:$0xff]
  %v792 = vld [vmem:[%s7 + $0x50] sm:$0xff]
  %v793 = vld [vmem:[%s7 + $0x58] sm:$0xff]
  %v794 = vld [vmem:[%s7 + $0x60] sm:$0xff]
  %v795 = vld [vmem:[%s7 + $0x68] sm:$0xff]
  %v796 = vld [vmem:[%s7 + $0x70] sm:$0xff]
  %v797 = vld [vmem:[%s7 + $0x78] sm:$0xff]
  %vm800 = vcmask 1041409
  %v801 = vsel %vm800, %v781, %v774
  %803 = vmatprep.subr.mxu0 0.0
  %804 = vmatpush1.msra.mxu0 %v782
  %805 = vmatprep.subr.mxu0 0.0
  %806 = vmatpush1.msra.mxu0 %v783
  %807 = vmatprep.subr.mxu0 0.0
  %808 = vmatpush1.msra.mxu0 %v784
  %809 = vmatprep.subr.mxu0 0.0
  %810 = vmatpush1.msra.mxu0 %v785
  %811 = vmatprep.subr.mxu0 0.0
  %812 = vmatpush1.msra.mxu0 %v786
  %813 = vmatprep.subr.mxu0 0.0
  %814 = vmatpush1.msra.mxu0 %v787
  %815 = vmatprep.subr.mxu0 0.0
  %816 = vmatpush1.msra.mxu0 %v788
  %817 = vmatprep.subr.mxu0 0.0
  %818 = vmatpush1.msra.mxu0 %v789
  %819 = vmatprep.subr.mxu0 0.0
  %820 = vmatpush1.msra.mxu0 %v790
  %821 = vmatprep.subr.mxu0 0.0
  %822 = vmatpush1.msra.mxu0 %v791
  %823 = vmatprep.subr.mxu0 0.0
  %824 = vmatpush1.msra.mxu0 %v792
  %825 = vmatprep.subr.mxu0 0.0
  %826 = vmatpush1.msra.mxu0 %v793
  %827 = vmatprep.subr.mxu0 0.0
  %828 = vmatpush1.msra.mxu0 %v794
  %829 = vmatprep.subr.mxu0 0.0
  %830 = vmatpush1.msra.mxu0 %v795
  %831 = vmatprep.subr.mxu0 0.0
  %832 = vmatpush1.msra.mxu0 %v796
  %833 = vmatprep.subr.mxu0 0.0
  %834 = vmatpush1.msra.mxu0 %v797
  %835 = vmatprep.subr.mxu0 0.0
  %836 = vmatpush1.msra.mxu0 0.0
  %837 = vmatprep.subr.mxu0 0.0
  %838 = vmatpush1.msra.mxu0 0.0
  %839 = vmatprep.subr.mxu0 0.0
  %840 = vmatpush1.msra.mxu0 0.0
  %841 = vmatprep.subr.mxu0 0.0
  %842 = vmatpush1.msra.mxu0 0.0
  %843 = vmatprep.subr.mxu0 0.0
  %844 = vmatpush1.msra.mxu0 0.0
  %845 = vmatprep.subr.mxu0 0.0
  %846 = vmatpush1.msra.mxu0 0.0
  %847 = vmatprep.subr.mxu0 0.0
  %848 = vmatpush1.msra.mxu0 0.0
  %849 = vmatprep.subr.mxu0 0.0
  %850 = vmatpush1.msra.mxu0 0.0
  %851 = vmatprep.subr.mxu0 0.0
  %852 = vmatpush1.msra.mxu0 0.0
  %853 = vmatprep.subr.mxu0 0.0
  %854 = vmatpush1.msra.mxu0 0.0
  %855 = vmatprep.subr.mxu0 0.0
  %856 = vmatpush1.msra.mxu0 0.0
  %857 = vmatprep.subr.mxu0 0.0
  %858 = vmatpush1.msra.mxu0 0.0
  %859 = vmatprep.subr.mxu0 0.0
  %860 = vmatpush1.msra.mxu0 0.0
  %861 = vmatprep.subr.mxu0 0.0
  %862 = vmatpush1.msra.mxu0 0.0
  %863 = vmatprep.subr.mxu0 0.0
  %864 = vmatpush1.msra.mxu0 0.0
  %865 = vmatprep.subr.mxu0 0.0
  %866 = vmatpush1.msra.mxu0 0.0
  %867 = vmatprep.mubr.f32.mxu0 0.0
  %868 = vmatmul.mubr.f32.gmra.mrb[0].mxu0 %v801
  %v869 = vpop.f32.mrb[0].mxu0
  %v870 = vadd.f32 0.0, %v869
  %v871 = vpop.f32.mrb[0].mxu0
  %872 = vdwg.mxu0
  %v873 = vsub.f32 0.0, %v870
  %v874 = vmul.f32 %v873, 1.442695
  %v875 = vpow.pop %v874
  %v876 = vadd.f32 %v875, 1.0
  %v877 = vrcp.pop %v876
  %v879 = vsel %vm246, %v877, 0
  %881 = vmatprep.subr.mxu0 0.0
  %882 = vmatpush1.msra.mxu0 %v36
  %883 = vmatprep.subr.mxu0 0.0
  %884 = vmatpush1.msra.mxu0 0.0
  %885 = vmatprep.subr.mxu0 0.0
  %886 = vmatpush1.msra.mxu0 0.0
  %887 = vmatprep.subr.mxu0 0.0
  %888 = vmatpush1.msra.mxu0 0.0
  %889 = vmatprep.subr.mxu0 0.0
  %890 = vmatpush1.msra.mxu0 0.0
  %891 = vmatprep.subr.mxu0 0.0
  %892 = vmatpush1.msra.mxu0 0.0
  %893 = vmatprep.subr.mxu0 0.0
  %894 = vmatpush1.msra.mxu0 0.0
  %895 = vmatprep.subr.mxu0 0.0
  %896 = vmatpush1.msra.mxu0 0.0
  %897 = vmatprep.subr.mxu0 0.0
  %898 = vmatpush1.msra.mxu0 0.0
  %899 = vmatprep.subr.mxu0 0.0
  %900 = vmatpush1.msra.mxu0 0.0
  %901 = vmatprep.subr.mxu0 0.0
  %902 = vmatpush1.msra.mxu0 0.0
  %903 = vmatprep.subr.mxu0 0.0
  %904 = vmatpush1.msra.mxu0 0.0
  %905 = vmatprep.subr.mxu0 0.0
  %906 = vmatpush1.msra.mxu0 0.0
  %907 = vmatprep.subr.mxu0 0.0
  %908 = vmatpush1.msra.mxu0 0.0
  %909 = vmatprep.subr.mxu0 0.0
  %910 = vmatpush1.msra.mxu0 0.0
  %911 = vmatprep.subr.mxu0 0.0
  %912 = vmatpush1.msra.mxu0 0.0
  %913 = vmatprep.subr.mxu0 0.0
  %914 = vmatpush1.msra.mxu0 0.0
  %915 = vmatprep.subr.mxu0 0.0
  %916 = vmatpush1.msra.mxu0 0.0
  %917 = vmatprep.subr.mxu0 0.0
  %918 = vmatpush1.msra.mxu0 0.0
  %919 = vmatprep.subr.mxu0 0.0
  %920 = vmatpush1.msra.mxu0 0.0
  %921 = vmatprep.subr.mxu0 0.0
  %922 = vmatpush1.msra.mxu0 0.0
  %923 = vmatprep.subr.mxu0 0.0
  %924 = vmatpush1.msra.mxu0 0.0
  %925 = vmatprep.subr.mxu0 0.0
  %926 = vmatpush1.msra.mxu0 0.0
  %927 = vmatprep.subr.mxu0 0.0
  %928 = vmatpush1.msra.mxu0 0.0
  %929 = vmatprep.subr.mxu0 0.0
  %930 = vmatpush1.msra.mxu0 0.0
  %931 = vmatprep.subr.mxu0 0.0
  %932 = vmatpush1.msra.mxu0 0.0
  %933 = vmatprep.subr.mxu0 0.0
  %934 = vmatpush1.msra.mxu0 0.0
  %935 = vmatprep.subr.mxu0 0.0
  %936 = vmatpush1.msra.mxu0 0.0
  %937 = vmatprep.subr.mxu0 0.0
  %938 = vmatpush1.msra.mxu0 0.0
  %939 = vmatprep.subr.mxu0 0.0
  %940 = vmatpush1.msra.mxu0 0.0
  %941 = vmatprep.subr.mxu0 0.0
  %942 = vmatpush1.msra.mxu0 0.0
  %943 = vmatprep.subr.mxu0 0.0
  %944 = vmatpush1.msra.mxu0 0.0
  %945 = vmatprep.mubr.f32.mxu0 0.0
  %946 = vmatmul.mubr.f32.gmra.mrb[0].mxu0 %v879
  %v947 = vpop.f32.mrb[0].mxu0
  %v948 = vadd.f32 0.0, %v947
  %v949 = vpop.f32.mrb[0].mxu0
  %950 = vdwg.mxu0
  %v953 = vunpack.c.l.s4 1966171168
  %v954 = vunpack.c.0.s8 %v953
  %v955 = vlaneseq
  %v956 = vshrl.u32 %v955, 7
  %v957 = vsub.s32 %v954, %v956
  %v958 = vrot.slane %v948, %v957
  %v959 = vcombine.high %v958, %v958
  %v961 = vunpack.c.l.s4 1966171168
  %v962 = vunpack.c.0.s8 %v961
  %v963 = vlaneseq
  %v964 = vshrl.u32 %v963, 7
  %v965 = vsub.s32 %v962, %v964
  %v966 = vrot.slane %v958, %v965
  %v968 = vunpack.c.l.s4 1966171168
  %v969 = vunpack.c.0.s8 %v968
  %v970 = vlaneseq
  %v971 = vshrl.u32 %v970, 7
  %v972 = vsub.s32 %v969, %v971
  %v973 = vrot.slane %v959, %v972
  %v974 = vlaneseq
  %v975 = vshrl.u32 %v974, 7
  %v976 = vsub.s32 0, %v975
  %v977 = vrot.slane %v966, %v976
  %v978 = vlaneseq
  %v979 = vshrl.u32 %v978, 7
  %v980 = vsub.s32 0, %v979
  %v981 = vrot.slane %v973, %v980
  %v984 = vmul.f32 %v754, %v977
  %v985 = vmul.f32 %v757, %v977
  %v986 = vmul.f32 %v762, %v981
  %v987 = vmul.f32 %v765, %v981
  %vm988 = vcmp.ge.f32.partialorder %v984, 0.0
  %vm989 = vcmp.ge.f32.partialorder %v985, 0.0
  %vm990 = vcmp.ge.f32.partialorder %v986, 0.0
  %vm991 = vcmp.ge.f32.partialorder %v987, 0.0
  %v992 = vmul.f32 %v984, 0.01
  %v993 = vmul.f32 %v985, 0.01
  %v994 = vmul.f32 %v986, 0.01
  %v995 = vmul.f32 %v987, 0.01
  %v996 = vsel %vm988, %v984, %v992
  %v997 = vsel %vm989, %v985, %v993
  %v998 = vsel %vm990, %v986, %v994
  %v999 = vsel %vm991, %v987, %v995
  %v1000 = vadd.f32 %v37, %v996
  %v1001 = vadd.f32 %v38, %v997
  %v1002 = vadd.f32 %v39, %v998
  %v1003 = vadd.f32 %v40, %v999
  %v1004 = vld [vmem:[%s3 + $0x2] sm:$0x1]
  %v1005 = vld [vmem:[%s3 + $0x3] sm:$0x1]
  %v1006 = vadd.f32 %v1000, %v1001
  %v1007 = vadd.f32 %v1006, %v1002
  %v1008 = vadd.f32 %v1007, %v1003
  %v1009 = vrot.slane %v1008, 4
  %v1010 = vadd.f32 %v1008, %v1009
  %v1011 = vrot.slane %v1010, 2
  %v1012 = vadd.f32 %v1010, %v1011
  %v1013 = vrot.slane %v1012, 1
  %v1014 = vadd.f32 %v1012, %v1013
  %v1015 = vmul.f32 %v1000, %v1000
  %v1016 = vmul.f32 %v1001, %v1001
  %v1017 = vmul.f32 %v1002, %v1002
  %v1018 = vmul.f32 %v1003, %v1003
  %v1019 = vadd.f32 %v1015, %v1016
  %v1020 = vadd.f32 %v1019, %v1017
  %v1021 = vadd.f32 %v1020, %v1018
  %v1022 = vrot.slane %v1021, 4
  %v1023 = vadd.f32 %v1021, %v1022
  %v1024 = vrot.slane %v1023, 2
  %v1025 = vadd.f32 %v1023, %v1024
  %v1026 = vrot.slane %v1025, 1
  %v1027 = vadd.f32 %v1025, %v1026
  %v1028 = vsel %vm145, %v1014, %v1027
  %1029 = vmatprep.subr.mxu0 0.0
  %1030 = vmatpush1.msra.mxu0 %v147
  %1031 = vmatprep.subr.mxu0 0.0
  %1032 = vmatpush1.msra.mxu0 %v148
  %1033 = vmatprep.subr.mxu0 0.0
  %1034 = vmatpush1.msra.mxu0 %v149
  %1035 = vmatprep.subr.mxu0 0.0
  %1036 = vmatpush1.msra.mxu0 %v150
  %1037 = vmatprep.subr.mxu0 0.0
  %1038 = vmatpush1.msra.mxu0 %v151
  %1039 = vmatprep.subr.mxu0 0.0
  %1040 = vmatpush1.msra.mxu0 %v152
  %1041 = vmatprep.subr.mxu0 0.0
  %1042 = vmatpush1.msra.mxu0 %v153
  %1043 = vmatprep.subr.mxu0 0.0
  %1044 = vmatpush1.msra.mxu0 %v154
  %1045 = vmatprep.subr.mxu0 0.0
  %1046 = vmatpush1.msra.mxu0 %v155
  %1047 = vmatprep.subr.mxu0 0.0
  %1048 = vmatpush1.msra.mxu0 %v156
  %1049 = vmatprep.subr.mxu0 0.0
  %1050 = vmatpush1.msra.mxu0 %v157
  %1051 = vmatprep.subr.mxu0 0.0
  %1052 = vmatpush1.msra.mxu0 %v158
  %1053 = vmatprep.subr.mxu0 0.0
  %1054 = vmatpush1.msra.mxu0 %v159
  %1055 = vmatprep.subr.mxu0 0.0
  %1056 = vmatpush1.msra.mxu0 %v160
  %1057 = vmatprep.subr.mxu0 0.0
  %1058 = vmatpush1.msra.mxu0 %v161
  %1059 = vmatprep.subr.mxu0 0.0
  %1060 = vmatpush1.msra.mxu0 %v162
  %1061 = vmatprep.subr.mxu0 0.0
  %1062 = vmatpush1.msra.mxu0 0.0
  %1063 = vmatprep.subr.mxu0 0.0
  %1064 = vmatpush1.msra.mxu0 0.0
  %1065 = vmatprep.subr.mxu0 0.0
  %1066 = vmatpush1.msra.mxu0 0.0
  %1067 = vmatprep.subr.mxu0 0.0
  %1068 = vmatpush1.msra.mxu0 0.0
  %1069 = vmatprep.subr.mxu0 0.0
  %1070 = vmatpush1.msra.mxu0 0.0
  %1071 = vmatprep.subr.mxu0 0.0
  %1072 = vmatpush1.msra.mxu0 0.0
  %1073 = vmatprep.subr.mxu0 0.0
  %1074 = vmatpush1.msra.mxu0 0.0
  %1075 = vmatprep.subr.mxu0 0.0
  %1076 = vmatpush1.msra.mxu0 0.0
  %1077 = vmatprep.subr.mxu0 0.0
  %1078 = vmatpush1.msra.mxu0 0.0
  %1079 = vmatprep.subr.mxu0 0.0
  %1080 = vmatpush1.msra.mxu0 0.0
  %1081 = vmatprep.subr.mxu0 0.0
  %1082 = vmatpush1.msra.mxu0 0.0
  %1083 = vmatprep.subr.mxu0 0.0
  %1084 = vmatpush1.msra.mxu0 0.0
  %1085 = vmatprep.subr.mxu0 0.0
  %1086 = vmatpush1.msra.mxu0 0.0
  %1087 = vmatprep.subr.mxu0 0.0
  %1088 = vmatpush1.msra.mxu0 0.0
  %1089 = vmatprep.subr.mxu0 0.0
  %1090 = vmatpush1.msra.mxu0 0.0
  %1091 = vmatprep.subr.mxu0 0.0
  %1092 = vmatpush1.msra.mxu0 0.0
  %1093 = vmatprep.mubr.f32.mxu0 0.0
  %1094 = vmatmul.mubr.f32.gmra.mrb[0].mxu0 %v1028
  %v1095 = vpop.f32.mrb[0].mxu0
  %v1096 = vadd.f32 0.0, %v1095
  %v1097 = vpop.f32.mrb[0].mxu0
  %1098 = vdwg.mxu0
  %v1099 = vmul.f32 %v1096, %v1096
  %v1101 = vrot.slane %v1099, 7
  %v1103 = vsub.f32 %v1096, %v1101
  %v1104 = vadd.f32 %v1103, 1e-05
  %v1105 = vrsqrt.pop %v1104
  %v1107 = vrot.slane %v1105, 1
  %v1109 = vmul.f32 %v1004, %v1107
  %v1110 = vmul.f32 %v1096, %v1109
  %v1111 = vsub.f32 %v1005, %v1110
  %v1113 = vsel %vm246, %v1109, 0
  %1115 = vmatprep.subr.mxu0 0.0
  %1116 = vmatpush1.msra.mxu0 %v36
  %1117 = vmatprep.subr.mxu0 0.0
  %1118 = vmatpush1.msra.mxu0 0.0
  %1119 = vmatprep.subr.mxu0 0.0
  %1120 = vmatpush1.msra.mxu0 0.0
  %1121 = vmatprep.subr.mxu0 0.0
  %1122 = vmatpush1.msra.mxu0 0.0
  %1123 = vmatprep.subr.mxu0 0.0
  %1124 = vmatpush1.msra.mxu0 0.0
  %1125 = vmatprep.subr.mxu0 0.0
  %1126 = vmatpush1.msra.mxu0 0.0
  %1127 = vmatprep.subr.mxu0 0.0
  %1128 = vmatpush1.msra.mxu0 0.0
  %1129 = vmatprep.subr.mxu0 0.0
  %1130 = vmatpush1.msra.mxu0 0.0
  %1131 = vmatprep.subr.mxu0 0.0
  %1132 = vmatpush1.msra.mxu0 0.0
  %1133 = vmatprep.subr.mxu0 0.0
  %1134 = vmatpush1.msra.mxu0 0.0
  %1135 = vmatprep.subr.mxu0 0.0
  %1136 = vmatpush1.msra.mxu0 0.0
  %1137 = vmatprep.subr.mxu0 0.0
  %1138 = vmatpush1.msra.mxu0 0.0
  %1139 = vmatprep.subr.mxu0 0.0
  %1140 = vmatpush1.msra.mxu0 0.0
  %1141 = vmatprep.subr.mxu0 0.0
  %1142 = vmatpush1.msra.mxu0 0.0
  %1143 = vmatprep.subr.mxu0 0.0
  %1144 = vmatpush1.msra.mxu0 0.0
  %1145 = vmatprep.subr.mxu0 0.0
  %1146 = vmatpush1.msra.mxu0 0.0
  %1147 = vmatprep.subr.mxu0 0.0
  %1148 = vmatpush1.msra.mxu0 0.0
  %1149 = vmatprep.subr.mxu0 0.0
  %1150 = vmatpush1.msra.mxu0 0.0
  %1151 = vmatprep.subr.mxu0 0.0
  %1152 = vmatpush1.msra.mxu0 0.0
  %1153 = vmatprep.subr.mxu0 0.0
  %1154 = vmatpush1.msra.mxu0 0.0
  %1155 = vmatprep.subr.mxu0 0.0
  %1156 = vmatpush1.msra.mxu0 0.0
  %1157 = vmatprep.subr.mxu0 0.0
  %1158 = vmatpush1.msra.mxu0 0.0
  %1159 = vmatprep.subr.mxu0 0.0
  %1160 = vmatpush1.msra.mxu0 0.0
  %1161 = vmatprep.subr.mxu0 0.0
  %1162 = vmatpush1.msra.mxu0 0.0
  %1163 = vmatprep.subr.mxu0 0.0
  %1164 = vmatpush1.msra.mxu0 0.0
  %1165 = vmatprep.subr.mxu0 0.0
  %1166 = vmatpush1.msra.mxu0 0.0
  %1167 = vmatprep.subr.mxu0 0.0
  %1168 = vmatpush1.msra.mxu0 0.0
  %1169 = vmatprep.subr.mxu0 0.0
  %1170 = vmatpush1.msra.mxu0 0.0
  %1171 = vmatprep.subr.mxu0 0.0
  %1172 = vmatpush1.msra.mxu0 0.0
  %1173 = vmatprep.subr.mxu0 0.0
  %1174 = vmatpush1.msra.mxu0 0.0
  %1175 = vmatprep.subr.mxu0 0.0
  %1176 = vmatpush1.msra.mxu0 0.0
  %1177 = vmatprep.subr.mxu0 0.0
  %1178 = vmatpush1.msra.mxu0 0.0
  %1179 = vmatprep.mubr.f32.mxu0 0.0
  %1180 = vmatmul.mubr.f32.gmra.mrb[0].mxu0 %v1113
  %v1181 = vpop.f32.mrb[0].mxu0
  %v1182 = vadd.f32 0.0, %v1181
  %v1183 = vpop.f32.mrb[0].mxu0
  %1184 = vdwg.mxu0
  %v1185 = vlaneseq
  %v1186 = vshrl.u32 %v1185, 7
  %v1187 = vsub.s32 0, %v1186
  %v1188 = vrot.slane %v1111, %v1187
  %1190 = vrot.lane.b32.xlu0 %v1188, 8
  %v1191 = vpop.permute.xlu0 %1190
  %v1193 = vadd.f32 %v118, %v1191
  %1195 = vrot.lane.b32.xlu0 %v1193, 120
  %v1196 = vpop.permute.xlu0 %1195
  %v1197 = vsel %vm246, %v1196, 0
  %1199 = vmatprep.subr.mxu0 0.0
  %1200 = vmatpush1.msra.mxu0 %v36
  %1201 = vmatprep.subr.mxu0 0.0
  %1202 = vmatpush1.msra.mxu0 0.0
  %1203 = vmatprep.subr.mxu0 0.0
  %1204 = vmatpush1.msra.mxu0 0.0
  %1205 = vmatprep.subr.mxu0 0.0
  %1206 = vmatpush1.msra.mxu0 0.0
  %1207 = vmatprep.subr.mxu0 0.0
  %1208 = vmatpush1.msra.mxu0 0.0
  %1209 = vmatprep.subr.mxu0 0.0
  %1210 = vmatpush1.msra.mxu0 0.0
  %1211 = vmatprep.subr.mxu0 0.0
  %1212 = vmatpush1.msra.mxu0 0.0
  %1213 = vmatprep.subr.mxu0 0.0
  %1214 = vmatpush1.msra.mxu0 0.0
  %1215 = vmatprep.subr.mxu0 0.0
  %1216 = vmatpush1.msra.mxu0 0.0
  %1217 = vmatprep.subr.mxu0 0.0
  %1218 = vmatpush1.msra.mxu0 0.0
  %1219 = vmatprep.subr.mxu0 0.0
  %1220 = vmatpush1.msra.mxu0 0.0
  %1221 = vmatprep.subr.mxu0 0.0
  %1222 = vmatpush1.msra.mxu0 0.0
  %1223 = vmatprep.subr.mxu0 0.0
  %1224 = vmatpush1.msra.mxu0 0.0
  %1225 = vmatprep.subr.mxu0 0.0
  %1226 = vmatpush1.msra.mxu0 0.0
  %1227 = vmatprep.subr.mxu0 0.0
  %1228 = vmatpush1.msra.mxu0 0.0
  %1229 = vmatprep.subr.mxu0 0.0
  %1230 = vmatpush1.msra.mxu0 0.0
  %1231 = vmatprep.subr.mxu0 0.0
  %1232 = vmatpush1.msra.mxu0 0.0
  %1233 = vmatprep.subr.mxu0 0.0
  %1234 = vmatpush1.msra.mxu0 0.0
  %1235 = vmatprep.subr.mxu0 0.0
  %1236 = vmatpush1.msra.mxu0 0.0
  %1237 = vmatprep.subr.mxu0 0.0
  %1238 = vmatpush1.msra.mxu0 0.0
  %1239 = vmatprep.subr.mxu0 0.0
  %1240 = vmatpush1.msra.mxu0 0.0
  %1241 = vmatprep.subr.mxu0 0.0
  %1242 = vmatpush1.msra.mxu0 0.0
  %1243 = vmatprep.subr.mxu0 0.0
  %1244 = vmatpush1.msra.mxu0 0.0
  %1245 = vmatprep.subr.mxu0 0.0
  %1246 = vmatpush1.msra.mxu0 0.0
  %1247 = vmatprep.subr.mxu0 0.0
  %1248 = vmatpush1.msra.mxu0 0.0
  %1249 = vmatprep.subr.mxu0 0.0
  %1250 = vmatpush1.msra.mxu0 0.0
  %1251 = vmatprep.subr.mxu0 0.0
  %1252 = vmatpush1.msra.mxu0 0.0
  %1253 = vmatprep.subr.mxu0 0.0
  %1254 = vmatpush1.msra.mxu0 0.0
  %1255 = vmatprep.subr.mxu0 0.0
  %1256 = vmatpush1.msra.mxu0 0.0
  %1257 = vmatprep.subr.mxu0 0.0
  %1258 = vmatpush1.msra.mxu0 0.0
  %1259 = vmatprep.subr.mxu0 0.0
  %1260 = vmatpush1.msra.mxu0 0.0
  %1261 = vmatprep.subr.mxu0 0.0
  %1262 = vmatpush1.msra.mxu0 0.0
  %1263 = vmatprep.mubr.f32.mxu0 0.0
  %1264 = vmatmul.mubr.f32.gmra.mrb[0].mxu0 %v1197
  %v1265 = vpop.f32.mrb[0].mxu0
  %v1266 = vadd.f32 0.0, %v1265
  %v1267 = vpop.f32.mrb[0].mxu0
  %1268 = vdwg.mxu0
  %v1269 = vlaneseq
  %v1270 = vshrl.u32 %v1269, 7
  %v1271 = vsub.s32 0, %v1270
  %v1272 = vrot.slane %v1182, %v1271
  %v1273 = vmul.f32 %v1000, %v1272
  %v1274 = vmul.f32 %v1001, %v1272
  %v1275 = vmul.f32 %v1002, %v1272
  %v1276 = vmul.f32 %v1003, %v1272
  %v1279 = vunpack.c.l.s4 1966171168
  %v1280 = vunpack.c.0.s8 %v1279
  %v1281 = vlaneseq
  %v1282 = vshrl.u32 %v1281, 7
  %v1283 = vsub.s32 %v1280, %v1282
  %v1284 = vrot.slane %v1266, %v1283
  %v1285 = vcombine.high %v1284, %v1284
  %v1287 = vunpack.c.l.s4 1966171168
  %v1288 = vunpack.c.0.s8 %v1287
  %v1289 = vlaneseq
  %v1290 = vshrl.u32 %v1289, 7
  %v1291 = vsub.s32 %v1288, %v1290
  %v1292 = vrot.slane %v1284, %v1291
  %v1294 = vunpack.c.l.s4 1966171168
  %v1295 = vunpack.c.0.s8 %v1294
  %v1296 = vlaneseq
  %v1297 = vshrl.u32 %v1296, 7
  %v1298 = vsub.s32 %v1295, %v1297
  %v1299 = vrot.slane %v1285, %v1298
  %v1300 = vlaneseq
  %v1301 = vshrl.u32 %v1300, 7
  %v1302 = vsub.s32 0, %v1301
  %v1303 = vrot.slane %v1292, %v1302
  %v1304 = vlaneseq
  %v1305 = vshrl.u32 %v1304, 7
  %v1306 = vsub.s32 0, %v1305
  %v1307 = vrot.slane %v1299, %v1306
  %v1310 = vadd.f32 %v1273, %v1303
  %v1311 = vadd.f32 %v1274, %v1303
  %v1312 = vadd.f32 %v1275, %v1307
  %v1313 = vadd.f32 %v1276, %v1307
  %v1314 = vpack.c.bf16 %v1311, %v1310
  %v1315 = vpack.c.bf16 %v1313, %v1312
  %v1316 = vld [vmem:[%s8] sm:$0xff]
  %v1317 = vld [vmem:[%s8 + $0x8] sm:$0xff]
  %v1318 = vld [vmem:[%s8 + $0x10] sm:$0xff]
  %v1319 = vld [vmem:[%s8 + $0x18] sm:$0xff]
  %v1320 = vld [vmem:[%s8 + $0x20] sm:$0xff]
  %v1321 = vld [vmem:[%s8 + $0x28] sm:$0xff]
  %v1322 = vld [vmem:[%s8 + $0x30] sm:$0xff]
  %v1323 = vld [vmem:[%s8 + $0x38] sm:$0xff]
  %v1324 = vld [vmem:[%s8 + $0x40] sm:$0xff]
  %v1325 = vld [vmem:[%s8 + $0x48] sm:$0xff]
  %v1326 = vld [vmem:[%s8 + $0x50] sm:$0xff]
  %v1327 = vld [vmem:[%s8 + $0x58] sm:$0xff]
  %v1328 = vld [vmem:[%s8 + $0x60] sm:$0xff]
  %v1329 = vld [vmem:[%s8 + $0x68] sm:$0xff]
  %v1330 = vld [vmem:[%s8 + $0x70] sm:$0xff]
  %v1331 = vld [vmem:[%s8 + $0x78] sm:$0xff]
  %v1332 = vld [vmem:[%s8 + $0x80] sm:$0xff]
  %v1333 = vld [vmem:[%s8 + $0x88] sm:$0xff]
  %v1334 = vld [vmem:[%s8 + $0x90] sm:$0xff]
  %v1335 = vld [vmem:[%s8 + $0x98] sm:$0xff]
  %v1336 = vld [vmem:[%s8 + $0xa0] sm:$0xff]
  %v1337 = vld [vmem:[%s8 + $0xa8] sm:$0xff]
  %v1338 = vld [vmem:[%s8 + $0xb0] sm:$0xff]
  %v1339 = vld [vmem:[%s8 + $0xb8] sm:$0xff]
  %v1340 = vld [vmem:[%s8 + $0xc0] sm:$0xff]
  %v1341 = vld [vmem:[%s8 + $0xc8] sm:$0xff]
  %v1342 = vld [vmem:[%s8 + $0xd0] sm:$0xff]
  %v1343 = vld [vmem:[%s8 + $0xd8] sm:$0xff]
  %v1344 = vld [vmem:[%s8 + $0xe0] sm:$0xff]
  %v1345 = vld [vmem:[%s8 + $0xe8] sm:$0xff]
  %v1346 = vld [vmem:[%s8 + $0xf0] sm:$0xff]
  %v1347 = vld [vmem:[%s8 + $0xf8] sm:$0xff]
  %v1380 = vunpack.c.l.b16 %v1316
  %v1381 = vunpack.c.h.b16 %v1316
  %v1382 = vunpack.c.l.b16 %v1317
  %v1383 = vunpack.c.h.b16 %v1317
  %v1384 = vunpack.c.l.b16 %v1318
  %v1385 = vunpack.c.h.b16 %v1318
  %v1386 = vunpack.c.l.b16 %v1319
  %v1387 = vunpack.c.h.b16 %v1319
  %v1388 = vunpack.c.l.b16 %v1320
  %v1389 = vunpack.c.h.b16 %v1320
  %v1390 = vunpack.c.l.b16 %v1321
  %v1391 = vunpack.c.h.b16 %v1321
  %v1392 = vunpack.c.l.b16 %v1322
  %v1393 = vunpack.c.h.b16 %v1322
  %v1394 = vunpack.c.l.b16 %v1323
  %v1395 = vunpack.c.h.b16 %v1323
  %v1396 = vunpack.c.l.b16 %v1324
  %v1397 = vunpack.c.h.b16 %v1324
  %v1398 = vunpack.c.l.b16 %v1325
  %v1399 = vunpack.c.h.b16 %v1325
  %v1400 = vunpack.c.l.b16 %v1326
  %v1401 = vunpack.c.h.b16 %v1326
  %v1402 = vunpack.c.l.b16 %v1327
  %v1403 = vunpack.c.h.b16 %v1327
  %v1404 = vunpack.c.l.b16 %v1328
  %v1405 = vunpack.c.h.b16 %v1328
  %v1406 = vunpack.c.l.b16 %v1329
  %v1407 = vunpack.c.h.b16 %v1329
  %v1408 = vunpack.c.l.b16 %v1330
  %v1409 = vunpack.c.h.b16 %v1330
  %v1410 = vunpack.c.l.b16 %v1331
  %v1411 = vunpack.c.h.b16 %v1331
  %v1412 = vunpack.c.l.b16 %v1332
  %v1413 = vunpack.c.h.b16 %v1332
  %v1414 = vunpack.c.l.b16 %v1333
  %v1415 = vunpack.c.h.b16 %v1333
  %v1416 = vunpack.c.l.b16 %v1334
  %v1417 = vunpack.c.h.b16 %v1334
  %v1418 = vunpack.c.l.b16 %v1335
  %v1419 = vunpack.c.h.b16 %v1335
  %v1420 = vunpack.c.l.b16 %v1336
  %v1421 = vunpack.c.h.b16 %v1336
  %v1422 = vunpack.c.l.b16 %v1337
  %v1423 = vunpack.c.h.b16 %v1337
  %v1424 = vunpack.c.l.b16 %v1338
  %v1425 = vunpack.c.h.b16 %v1338
  %v1426 = vunpack.c.l.b16 %v1339
  %v1427 = vunpack.c.h.b16 %v1339
  %v1428 = vunpack.c.l.b16 %v1340
  %v1429 = vunpack.c.h.b16 %v1340
  %v1430 = vunpack.c.l.b16 %v1341
  %v1431 = vunpack.c.h.b16 %v1341
  %v1432 = vunpack.c.l.b16 %v1342
  %v1433 = vunpack.c.h.b16 %v1342
  %v1434 = vunpack.c.l.b16 %v1343
  %v1435 = vunpack.c.h.b16 %v1343
  %v1436 = vunpack.c.l.b16 %v1344
  %v1437 = vunpack.c.h.b16 %v1344
  %v1438 = vunpack.c.l.b16 %v1345
  %v1439 = vunpack.c.h.b16 %v1345
  %v1440 = vunpack.c.l.b16 %v1346
  %v1441 = vunpack.c.h.b16 %v1346
  %v1442 = vunpack.c.l.b16 %v1347
  %v1443 = vunpack.c.h.b16 %v1347
  %v1444 = vpack.c.b16 %v1384, %v1380
  %v1445 = vpack.c.b16 %v1385, %v1381
  %v1446 = vpack.c.b16 %v1386, %v1382
  %v1447 = vpack.c.b16 %v1387, %v1383
  %v1448 = vpack.c.b16 %v1392, %v1388
  %v1449 = vpack.c.b16 %v1393, %v1389
  %v1450 = vpack.c.b16 %v1394, %v1390
  %v1451 = vpack.c.b16 %v1395, %v1391
  %v1452 = vpack.c.b16 %v1400, %v1396
  %v1453 = vpack.c.b16 %v1401, %v1397
  %v1454 = vpack.c.b16 %v1402, %v1398
  %v1455 = vpack.c.b16 %v1403, %v1399
  %v1456 = vpack.c.b16 %v1408, %v1404
  %v1457 = vpack.c.b16 %v1409, %v1405
  %v1458 = vpack.c.b16 %v1410, %v1406
  %v1459 = vpack.c.b16 %v1411, %v1407
  %v1460 = vpack.c.b16 %v1416, %v1412
  %v1461 = vpack.c.b16 %v1417, %v1413
  %v1462 = vpack.c.b16 %v1418, %v1414
  %v1463 = vpack.c.b16 %v1419, %v1415
  %v1464 = vpack.c.b16 %v1424, %v1420
  %v1465 = vpack.c.b16 %v1425, %v1421
  %v1466 = vpack.c.b16 %v1426, %v1422
  %v1467 = vpack.c.b16 %v1427, %v1423
  %v1468 = vpack.c.b16 %v1432, %v1428
  %v1469 = vpack.c.b16 %v1433, %v1429
  %v1470 = vpack.c.b16 %v1434, %v1430
  %v1471 = vpack.c.b16 %v1435, %v1431
  %v1472 = vpack.c.b16 %v1440, %v1436
  %v1473 = vpack.c.b16 %v1441, %v1437
  %v1474 = vpack.c.b16 %v1442, %v1438
  %v1475 = vpack.c.b16 %v1443, %v1439
  %1508 = vmatprep.subr.bf16.mxu0 %v1445
  %1509 = vmatpush1.bf16.msra.mxu0 %v1444
  %1510 = vmatprep.subr.bf16.mxu0 %v1449
  %1511 = vmatpush1.bf16.msra.mxu0 %v1448
  %1512 = vmatprep.subr.bf16.mxu0 %v1453
  %1513 = vmatpush1.bf16.msra.mxu0 %v1452
  %1514 = vmatprep.subr.bf16.mxu0 %v1457
  %1515 = vmatpush1.bf16.msra.mxu0 %v1456
  %1516 = vmatprep.subr.bf16.mxu0 %v1461
  %1517 = vmatpush1.bf16.msra.mxu0 %v1460
  %1518 = vmatprep.subr.bf16.mxu0 %v1465
  %1519 = vmatpush1.bf16.msra.mxu0 %v1464
  %1520 = vmatprep.subr.bf16.mxu0 %v1469
  %1521 = vmatpush1.bf16.msra.mxu0 %v1468
  %1522 = vmatprep.subr.bf16.mxu0 %v1473
  %1523 = vmatpush1.bf16.msra.mxu0 %v1472
  %1524 = vmatprep.subr.bf16.mxu0 0
  %1525 = vmatpush1.bf16.msra.mxu0 0
  %1526 = vmatprep.subr.bf16.mxu0 0
  %1527 = vmatpush1.bf16.msra.mxu0 0
  %1528 = vmatprep.subr.bf16.mxu0 0
  %1529 = vmatpush1.bf16.msra.mxu0 0
  %1530 = vmatprep.subr.bf16.mxu0 0
  %1531 = vmatpush1.bf16.msra.mxu0 0
  %1532 = vmatprep.subr.bf16.mxu0 0
  %1533 = vmatpush1.bf16.msra.mxu0 0
  %1534 = vmatprep.subr.bf16.mxu0 0
  %1535 = vmatpush1.bf16.msra.mxu0 0
  %1536 = vmatprep.subr.bf16.mxu0 0
  %1537 = vmatpush1.bf16.msra.mxu0 0
  %1538 = vmatprep.subr.bf16.mxu0 0
  %1539 = vmatpush1.bf16.msra.mxu0 0
  %1540 = vmatprep.mubr.bf16.mxu0 0
  %1541 = vmatmul.mubr.bf16.gmra.mrb[0].mxu0 %v1314
  %v1542 = vpop.f32.mrb[0].mxu0
  %v1543 = vadd.f32 0.0, %v1542
  %v1544 = vpop.f32.mrb[0].mxu0
  %v1545 = vadd.f32 0.0, %v1544
  %v1546 = vpop.f32.mrb[0].mxu0
  %v1547 = vadd.f32 0.0, %v1546
  %v1548 = vpop.f32.mrb[0].mxu0
  %v1549 = vadd.f32 0.0, %v1548
  %1550 = vmatprep.mubr.bf16.mxu0 0
  %1551 = vmatmul.mubr.bf16.gmra.mrb[0].mxu0 %v1315
  %v1552 = vpop.f32.mrb[0].mxu0
  %v1553 = vadd.f32 0.0, %v1552
  %v1554 = vpop.f32.mrb[0].mxu0
  %v1555 = vadd.f32 0.0, %v1554
  %v1556 = vpop.f32.mrb[0].mxu0
  %v1557 = vadd.f32 0.0, %v1556
  %v1558 = vpop.f32.mrb[0].mxu0
  %v1559 = vadd.f32 0.0, %v1558
  %1560 = vdwg.mxu0
  %1561 = vmatprep.subr.bf16.mxu0 %v1447
  %1562 = vmatpush1.bf16.msra.mxu0 %v1446
  %1563 = vmatprep.subr.bf16.mxu0 %v1451
  %1564 = vmatpush1.bf16.msra.mxu0 %v1450
  %1565 = vmatprep.subr.bf16.mxu0 %v1455
  %1566 = vmatpush1.bf16.msra.mxu0 %v1454
  %1567 = vmatprep.subr.bf16.mxu0 %v1459
  %1568 = vmatpush1.bf16.msra.mxu0 %v1458
  %1569 = vmatprep.subr.bf16.mxu0 %v1463
  %1570 = vmatpush1.bf16.msra.mxu0 %v1462
  %1571 = vmatprep.subr.bf16.mxu0 %v1467
  %1572 = vmatpush1.bf16.msra.mxu0 %v1466
  %1573 = vmatprep.subr.bf16.mxu0 %v1471
  %1574 = vmatpush1.bf16.msra.mxu0 %v1470
  %1575 = vmatprep.subr.bf16.mxu0 %v1475
  %1576 = vmatpush1.bf16.msra.mxu0 %v1474
  %1577 = vmatprep.subr.bf16.mxu0 0
  %1578 = vmatpush1.bf16.msra.mxu0 0
  %1579 = vmatprep.subr.bf16.mxu0 0
  %1580 = vmatpush1.bf16.msra.mxu0 0
  %1581 = vmatprep.subr.bf16.mxu0 0
  %1582 = vmatpush1.bf16.msra.mxu0 0
  %1583 = vmatprep.subr.bf16.mxu0 0
  %1584 = vmatpush1.bf16.msra.mxu0 0
  %1585 = vmatprep.subr.bf16.mxu0 0
  %1586 = vmatpush1.bf16.msra.mxu0 0
  %1587 = vmatprep.subr.bf16.mxu0 0
  %1588 = vmatpush1.bf16.msra.mxu0 0
  %1589 = vmatprep.subr.bf16.mxu0 0
  %1590 = vmatpush1.bf16.msra.mxu0 0
  %1591 = vmatprep.subr.bf16.mxu0 0
  %1592 = vmatpush1.bf16.msra.mxu0 0
  %1593 = vmatprep.mubr.bf16.mxu0 0
  %1594 = vmatmul.mubr.bf16.gmra.mrb[0].mxu0 %v1314
  %v1595 = vpop.f32.mrb[0].mxu0
  %v1596 = vadd.f32 0.0, %v1595
  %v1597 = vpop.f32.mrb[0].mxu0
  %v1598 = vadd.f32 0.0, %v1597
  %v1599 = vpop.f32.mrb[0].mxu0
  %v1600 = vadd.f32 0.0, %v1599
  %v1601 = vpop.f32.mrb[0].mxu0
  %v1602 = vadd.f32 0.0, %v1601
  %1603 = vmatprep.mubr.bf16.mxu0 0
  %1604 = vmatmul.mubr.bf16.gmra.mrb[0].mxu0 %v1315
  %v1605 = vpop.f32.mrb[0].mxu0
  %v1606 = vadd.f32 0.0, %v1605
  %v1607 = vpop.f32.mrb[0].mxu0
  %v1608 = vadd.f32 0.0, %v1607
  %v1609 = vpop.f32.mrb[0].mxu0
  %v1610 = vadd.f32 0.0, %v1609
  %v1611 = vpop.f32.mrb[0].mxu0
  %v1612 = vadd.f32 0.0, %v1611
  %1613 = vdwg.mxu0
  %vm1614 = vcmp.ge.f32.partialorder %v1543, 0.0
  %vm1615 = vcmp.ge.f32.partialorder %v1545, 0.0
  %vm1616 = vcmp.ge.f32.partialorder %v1596, 0.0
  %vm1617 = vcmp.ge.f32.partialorder %v1598, 0.0
  %vm1618 = vcmp.ge.f32.partialorder %v1547, 0.0
  %vm1619 = vcmp.ge.f32.partialorder %v1549, 0.0
  %vm1620 = vcmp.ge.f32.partialorder %v1600, 0.0
  %vm1621 = vcmp.ge.f32.partialorder %v1602, 0.0
  %vm1622 = vcmp.ge.f32.partialorder %v1553, 0.0
  %vm1623 = vcmp.ge.f32.partialorder %v1555, 0.0
  %vm1624 = vcmp.ge.f32.partialorder %v1606, 0.0
  %vm1625 = vcmp.ge.f32.partialorder %v1608, 0.0
  %vm1626 = vcmp.ge.f32.partialorder %v1557, 0.0
  %vm1627 = vcmp.ge.f32.partialorder %v1559, 0.0
  %vm1628 = vcmp.ge.f32.partialorder %v1610, 0.0
  %vm1629 = vcmp.ge.f32.partialorder %v1612, 0.0
  %v1630 = vmul.f32 %v1543, 0.01
  %v1631 = vmul.f32 %v1545, 0.01
  %v1632 = vmul.f32 %v1596, 0.01
  %v1633 = vmul.f32 %v1598, 0.01
  %v1634 = vmul.f32 %v1547, 0.01
  %v1635 = vmul.f32 %v1549, 0.01
  %v1636 = vmul.f32 %v1600, 0.01
  %v1637 = vmul.f32 %v1602, 0.01
  %v1638 = vmul.f32 %v1553, 0.01
  %v1639 = vmul.f32 %v1555, 0.01
  %v1640 = vmul.f32 %v1606, 0.01
  %v1641 = vmul.f32 %v1608, 0.01
  %v1642 = vmul.f32 %v1557, 0.01
  %v1643 = vmul.f32 %v1559, 0.01
  %v1644 = vmul.f32 %v1610, 0.01
  %v1645 = vmul.f32 %v1612, 0.01
  %v1646 = vsel %vm1614, %v1543, %v1630
  %v1647 = vsel %vm1615, %v1545, %v1631
  %v1648 = vsel %vm1616, %v1596, %v1632
  %v1649 = vsel %vm1617, %v1598, %v1633
  %v1650 = vsel %vm1618, %v1547, %v1634
  %v1651 = vsel %vm1619, %v1549, %v1635
  %v1652 = vsel %vm1620, %v1600, %v1636
  %v1653 = vsel %vm1621, %v1602, %v1637
  %v1654 = vsel %vm1622, %v1553, %v1638
  %v1655 = vsel %vm1623, %v1555, %v1639
  %v1656 = vsel %vm1624, %v1606, %v1640
  %v1657 = vsel %vm1625, %v1608, %v1641
  %v1658 = vsel %vm1626, %v1557, %v1642
  %v1659 = vsel %vm1627, %v1559, %v1643
  %v1660 = vsel %vm1628, %v1610, %v1644
  %v1661 = vsel %vm1629, %v1612, %v1645
  %v1662 = vpack.c.bf16 %v1650, %v1646
  %v1663 = vpack.c.bf16 %v1651, %v1647
  %v1664 = vpack.c.bf16 %v1652, %v1648
  %v1665 = vpack.c.bf16 %v1653, %v1649
  %v1666 = vpack.c.bf16 %v1658, %v1654
  %v1667 = vpack.c.bf16 %v1659, %v1655
  %v1668 = vpack.c.bf16 %v1660, %v1656
  %v1669 = vpack.c.bf16 %v1661, %v1657
  %v1670 = vld [vmem:[%s9] sm:$0xf]
  %v1671 = vld [vmem:[%s9 + $0x4] sm:$0xf]
  %v1672 = vld [vmem:[%s9 + $0x8] sm:$0xf]
  %v1673 = vld [vmem:[%s9 + $0xc] sm:$0xf]
  %v1674 = vld [vmem:[%s9 + $0x10] sm:$0xf]
  %v1675 = vld [vmem:[%s9 + $0x14] sm:$0xf]
  %v1676 = vld [vmem:[%s9 + $0x18] sm:$0xf]
  %v1677 = vld [vmem:[%s9 + $0x1c] sm:$0xf]
  %v1678 = vld [vmem:[%s9 + $0x20] sm:$0xf]
  %v1679 = vld [vmem:[%s9 + $0x24] sm:$0xf]
  %v1680 = vld [vmem:[%s9 + $0x28] sm:$0xf]
  %v1681 = vld [vmem:[%s9 + $0x2c] sm:$0xf]
  %v1682 = vld [vmem:[%s9 + $0x30] sm:$0xf]
  %v1683 = vld [vmem:[%s9 + $0x34] sm:$0xf]
  %v1684 = vld [vmem:[%s9 + $0x38] sm:$0xf]
  %v1685 = vld [vmem:[%s9 + $0x3c] sm:$0xf]
  %v1686 = vld [vmem:[%s9 + $0x40] sm:$0xf]
  %v1687 = vld [vmem:[%s9 + $0x44] sm:$0xf]
  %v1688 = vld [vmem:[%s9 + $0x48] sm:$0xf]
  %v1689 = vld [vmem:[%s9 + $0x4c] sm:$0xf]
  %v1690 = vld [vmem:[%s9 + $0x50] sm:$0xf]
  %v1691 = vld [vmem:[%s9 + $0x54] sm:$0xf]
  %v1692 = vld [vmem:[%s9 + $0x58] sm:$0xf]
  %v1693 = vld [vmem:[%s9 + $0x5c] sm:$0xf]
  %v1694 = vld [vmem:[%s9 + $0x60] sm:$0xf]
  %v1695 = vld [vmem:[%s9 + $0x64] sm:$0xf]
  %v1696 = vld [vmem:[%s9 + $0x68] sm:$0xf]
  %v1697 = vld [vmem:[%s9 + $0x6c] sm:$0xf]
  %v1698 = vld [vmem:[%s9 + $0x70] sm:$0xf]
  %v1699 = vld [vmem:[%s9 + $0x74] sm:$0xf]
  %v1700 = vld [vmem:[%s9 + $0x78] sm:$0xf]
  %v1701 = vld [vmem:[%s9 + $0x7c] sm:$0xf]
  %v1702 = vld [vmem:[%s9 + $0x80] sm:$0xf]
  %v1703 = vld [vmem:[%s9 + $0x84] sm:$0xf]
  %v1704 = vld [vmem:[%s9 + $0x88] sm:$0xf]
  %v1705 = vld [vmem:[%s9 + $0x8c] sm:$0xf]
  %v1706 = vld [vmem:[%s9 + $0x90] sm:$0xf]
  %v1707 = vld [vmem:[%s9 + $0x94] sm:$0xf]
  %v1708 = vld [vmem:[%s9 + $0x98] sm:$0xf]
  %v1709 = vld [vmem:[%s9 + $0x9c] sm:$0xf]
  %v1710 = vld [vmem:[%s9 + $0xa0] sm:$0xf]
  %v1711 = vld [vmem:[%s9 + $0xa4] sm:$0xf]
  %v1712 = vld [vmem:[%s9 + $0xa8] sm:$0xf]
  %v1713 = vld [vmem:[%s9 + $0xac] sm:$0xf]
  %v1714 = vld [vmem:[%s9 + $0xb0] sm:$0xf]
  %v1715 = vld [vmem:[%s9 + $0xb4] sm:$0xf]
  %v1716 = vld [vmem:[%s9 + $0xb8] sm:$0xf]
  %v1717 = vld [vmem:[%s9 + $0xbc] sm:$0xf]
  %v1718 = vld [vmem:[%s9 + $0xc0] sm:$0xf]
  %v1719 = vld [vmem:[%s9 + $0xc4] sm:$0xf]
  %v1720 = vld [vmem:[%s9 + $0xc8] sm:$0xf]
  %v1721 = vld [vmem:[%s9 + $0xcc] sm:$0xf]
  %v1722 = vld [vmem:[%s9 + $0xd0] sm:$0xf]
  %v1723 = vld [vmem:[%s9 + $0xd4] sm:$0xf]
  %v1724 = vld [vmem:[%s9 + $0xd8] sm:$0xf]
  %v1725 = vld [vmem:[%s9 + $0xdc] sm:$0xf]
  %v1726 = vld [vmem:[%s9 + $0xe0] sm:$0xf]
  %v1727 = vld [vmem:[%s9 + $0xe4] sm:$0xf]
  %v1728 = vld [vmem:[%s9 + $0xe8] sm:$0xf]
  %v1729 = vld [vmem:[%s9 + $0xec] sm:$0xf]
  %v1730 = vld [vmem:[%s9 + $0xf0] sm:$0xf]
  %v1731 = vld [vmem:[%s9 + $0xf4] sm:$0xf]
  %v1732 = vld [vmem:[%s9 + $0xf8] sm:$0xf]
  %v1733 = vld [vmem:[%s9 + $0xfc] sm:$0xf]
  %v1798 = vunpack.c.l.b16 %v1670
  %v1799 = vunpack.c.l.b16 %v1671
  %v1800 = vunpack.c.l.b16 %v1672
  %v1801 = vunpack.c.l.b16 %v1673
  %v1802 = vunpack.c.l.b16 %v1674
  %v1803 = vunpack.c.l.b16 %v1675
  %v1804 = vunpack.c.l.b16 %v1676
  %v1805 = vunpack.c.l.b16 %v1677
  %v1806 = vunpack.c.l.b16 %v1678
  %v1807 = vunpack.c.l.b16 %v1679
  %v1808 = vunpack.c.l.b16 %v1680
  %v1809 = vunpack.c.l.b16 %v1681
  %v1810 = vunpack.c.l.b16 %v1682
  %v1811 = vunpack.c.l.b16 %v1683
  %v1812 = vunpack.c.l.b16 %v1684
  %v1813 = vunpack.c.l.b16 %v1685
  %v1814 = vunpack.c.l.b16 %v1686
  %v1815 = vunpack.c.l.b16 %v1687
  %v1816 = vunpack.c.l.b16 %v1688
  %v1817 = vunpack.c.l.b16 %v1689
  %v1818 = vunpack.c.l.b16 %v1690
  %v1819 = vunpack.c.l.b16 %v1691
  %v1820 = vunpack.c.l.b16 %v1692
  %v1821 = vunpack.c.l.b16 %v1693
  %v1822 = vunpack.c.l.b16 %v1694
  %v1823 = vunpack.c.l.b16 %v1695
  %v1824 = vunpack.c.l.b16 %v1696
  %v1825 = vunpack.c.l.b16 %v1697
  %v1826 = vunpack.c.l.b16 %v1698
  %v1827 = vunpack.c.l.b16 %v1699
  %v1828 = vunpack.c.l.b16 %v1700
  %v1829 = vunpack.c.l.b16 %v1701
  %v1830 = vunpack.c.l.b16 %v1702
  %v1831 = vunpack.c.l.b16 %v1703
  %v1832 = vunpack.c.l.b16 %v1704
  %v1833 = vunpack.c.l.b16 %v1705
  %v1834 = vunpack.c.l.b16 %v1706
  %v1835 = vunpack.c.l.b16 %v1707
  %v1836 = vunpack.c.l.b16 %v1708
  %v1837 = vunpack.c.l.b16 %v1709
  %v1838 = vunpack.c.l.b16 %v1710
  %v1839 = vunpack.c.l.b16 %v1711
  %v1840 = vunpack.c.l.b16 %v1712
  %v1841 = vunpack.c.l.b16 %v1713
  %v1842 = vunpack.c.l.b16 %v1714
  %v1843 = vunpack.c.l.b16 %v1715
  %v1844 = vunpack.c.l.b16 %v1716
  %v1845 = vunpack.c.l.b16 %v1717
  %v1846 = vunpack.c.l.b16 %v1718
  %v1847 = vunpack.c.l.b16 %v1719
  %v1848 = vunpack.c.l.b16 %v1720
  %v1849 = vunpack.c.l.b16 %v1721
  %v1850 = vunpack.c.l.b16 %v1722
  %v1851 = vunpack.c.l.b16 %v1723
  %v1852 = vunpack.c.l.b16 %v1724
  %v1853 = vunpack.c.l.b16 %v1725
  %v1854 = vunpack.c.l.b16 %v1726
  %v1855 = vunpack.c.l.b16 %v1727
  %v1856 = vunpack.c.l.b16 %v1728
  %v1857 = vunpack.c.l.b16 %v1729
  %v1858 = vunpack.c.l.b16 %v1730
  %v1859 = vunpack.c.l.b16 %v1731
  %v1860 = vunpack.c.l.b16 %v1732
  %v1861 = vunpack.c.l.b16 %v1733
  %v1862 = vpack.c.b16 %v1799, %v1798
  %v1863 = vpack.c.b16 %v1801, %v1800
  %v1864 = vpack.c.b16 %v1803, %v1802
  %v1865 = vpack.c.b16 %v1805, %v1804
  %v1866 = vpack.c.b16 %v1807, %v1806
  %v1867 = vpack.c.b16 %v1809, %v1808
  %v1868 = vpack.c.b16 %v1811, %v1810
  %v1869 = vpack.c.b16 %v1813, %v1812
  %v1870 = vpack.c.b16 %v1815, %v1814
  %v1871 = vpack.c.b16 %v1817, %v1816
  %v1872 = vpack.c.b16 %v1819, %v1818
  %v1873 = vpack.c.b16 %v1821, %v1820
  %v1874 = vpack.c.b16 %v1823, %v1822
  %v1875 = vpack.c.b16 %v1825, %v1824
  %v1876 = vpack.c.b16 %v1827, %v1826
  %v1877 = vpack.c.b16 %v1829, %v1828
  %v1878 = vpack.c.b16 %v1831, %v1830
  %v1879 = vpack.c.b16 %v1833, %v1832
  %v1880 = vpack.c.b16 %v1835, %v1834
  %v1881 = vpack.c.b16 %v1837, %v1836
  %v1882 = vpack.c.b16 %v1839, %v1838
  %v1883 = vpack.c.b16 %v1841, %v1840
  %v1884 = vpack.c.b16 %v1843, %v1842
  %v1885 = vpack.c.b16 %v1845, %v1844
  %v1886 = vpack.c.b16 %v1847, %v1846
  %v1887 = vpack.c.b16 %v1849, %v1848
  %v1888 = vpack.c.b16 %v1851, %v1850
  %v1889 = vpack.c.b16 %v1853, %v1852
  %v1890 = vpack.c.b16 %v1855, %v1854
  %v1891 = vpack.c.b16 %v1857, %v1856
  %v1892 = vpack.c.b16 %v1859, %v1858
  %v1893 = vpack.c.b16 %v1861, %v1860
  %1926 = vmatprep.subr.bf16.mxu0 0
  %1927 = vmatpush1.bf16.msra.mxu0 %v1862
  %1928 = vmatprep.subr.bf16.mxu0 0
  %1929 = vmatpush1.bf16.msra.mxu0 %v1863
  %1930 = vmatprep.subr.bf16.mxu0 0
  %1931 = vmatpush1.bf16.msra.mxu0 %v1864
  %1932 = vmatprep.subr.bf16.mxu0 0
  %1933 = vmatpush1.bf16.msra.mxu0 %v1865
  %1934 = vmatprep.subr.bf16.mxu0 0
  %1935 = vmatpush1.bf16.msra.mxu0 %v1866
  %1936 = vmatprep.subr.bf16.mxu0 0
  %1937 = vmatpush1.bf16.msra.mxu0 %v1867
  %1938 = vmatprep.subr.bf16.mxu0 0
  %1939 = vmatpush1.bf16.msra.mxu0 %v1868
  %1940 = vmatprep.subr.bf16.mxu0 0
  %1941 = vmatpush1.bf16.msra.mxu0 %v1869
  %1942 = vmatprep.subr.bf16.mxu0 0
  %1943 = vmatpush1.bf16.msra.mxu0 %v1870
  %1944 = vmatprep.subr.bf16.mxu0 0
  %1945 = vmatpush1.bf16.msra.mxu0 %v1871
  %1946 = vmatprep.subr.bf16.mxu0 0
  %1947 = vmatpush1.bf16.msra.mxu0 %v1872
  %1948 = vmatprep.subr.bf16.mxu0 0
  %1949 = vmatpush1.bf16.msra.mxu0 %v1873
  %1950 = vmatprep.subr.bf16.mxu0 0
  %1951 = vmatpush1.bf16.msra.mxu0 %v1874
  %1952 = vmatprep.subr.bf16.mxu0 0
  %1953 = vmatpush1.bf16.msra.mxu0 %v1875
  %1954 = vmatprep.subr.bf16.mxu0 0
  %1955 = vmatpush1.bf16.msra.mxu0 %v1876
  %1956 = vmatprep.subr.bf16.mxu0 0
  %1957 = vmatpush1.bf16.msra.mxu0 %v1877
  %1958 = vmatprep.mubr.bf16.mxu0 %v1663
  %1959 = vmatmul.mubr.bf16.gmra.mrb[0].mxu0 %v1662
  %v1960 = vpop.f32.mrb[0].mxu0
  %v1961 = vadd.f32 0.0, %v1960
  %v1962 = vpop.f32.mrb[0].mxu0
  %v1963 = vpop.f32.mrb[0].mxu0
  %v1964 = vadd.f32 0.0, %v1963
  %v1965 = vpop.f32.mrb[0].mxu0
  %1966 = vmatprep.mubr.bf16.mxu0 %v1667
  %1967 = vmatmul.mubr.bf16.gmra.mrb[0].mxu0 %v1666
  %v1968 = vpop.f32.mrb[0].mxu0
  %v1969 = vadd.f32 0.0, %v1968
  %v1970 = vpop.f32.mrb[0].mxu0
  %v1971 = vpop.f32.mrb[0].mxu0
  %v1972 = vadd.f32 0.0, %v1971
  %v1973 = vpop.f32.mrb[0].mxu0
  %1974 = vdwg.mxu0
  %1975 = vmatprep.subr.bf16.mxu0 0
  %1976 = vmatpush1.bf16.msra.mxu0 %v1878
  %1977 = vmatprep.subr.bf16.mxu0 0
  %1978 = vmatpush1.bf16.msra.mxu0 %v1879
  %1979 = vmatprep.subr.bf16.mxu0 0
  %1980 = vmatpush1.bf16.msra.mxu0 %v1880
  %1981 = vmatprep.subr.bf16.mxu0 0
  %1982 = vmatpush1.bf16.msra.mxu0 %v1881
  %1983 = vmatprep.subr.bf16.mxu0 0
  %1984 = vmatpush1.bf16.msra.mxu0 %v1882
  %1985 = vmatprep.subr.bf16.mxu0 0
  %1986 = vmatpush1.bf16.msra.mxu0 %v1883
  %1987 = vmatprep.subr.bf16.mxu0 0
  %1988 = vmatpush1.bf16.msra.mxu0 %v1884
  %1989 = vmatprep.subr.bf16.mxu0 0
  %1990 = vmatpush1.bf16.msra.mxu0 %v1885
  %1991 = vmatprep.subr.bf16.mxu0 0
  %1992 = vmatpush1.bf16.msra.mxu0 %v1886
  %1993 = vmatprep.subr.bf16.mxu0 0
  %1994 = vmatpush1.bf16.msra.mxu0 %v1887
  %1995 = vmatprep.subr.bf16.mxu0 0
  %1996 = vmatpush1.bf16.msra.mxu0 %v1888
  %1997 = vmatprep.subr.bf16.mxu0 0
  %1998 = vmatpush1.bf16.msra.mxu0 %v1889
  %1999 = vmatprep.subr.bf16.mxu0 0
  %2000 = vmatpush1.bf16.msra.mxu0 %v1890
  %2001 = vmatprep.subr.bf16.mxu0 0
  %2002 = vmatpush1.bf16.msra.mxu0 %v1891
  %2003 = vmatprep.subr.bf16.mxu0 0
  %2004 = vmatpush1.bf16.msra.mxu0 %v1892
  %2005 = vmatprep.subr.bf16.mxu0 0
  %2006 = vmatpush1.bf16.msra.mxu0 %v1893
  %2007 = vmatprep.mubr.bf16.mxu0 %v1665
  %2008 = vmatmul.mubr.bf16.gmra.mrb[0].mxu0 %v1664
  %v2009 = vpop.f32.mrb[0].mxu0
  %v2010 = vadd.f32 %v1961, %v2009
  %v2011 = vpop.f32.mrb[0].mxu0
  %v2012 = vpop.f32.mrb[0].mxu0
  %v2013 = vadd.f32 %v1964, %v2012
  %v2014 = vpop.f32.mrb[0].mxu0
  %2015 = vmatprep.mubr.bf16.mxu0 %v1669
  %2016 = vmatmul.mubr.bf16.gmra.mrb[0].mxu0 %v1668
  %v2017 = vpop.f32.mrb[0].mxu0
  %v2018 = vadd.f32 %v1969, %v2017
  %v2019 = vpop.f32.mrb[0].mxu0
  %v2020 = vpop.f32.mrb[0].mxu0
  %v2021 = vadd.f32 %v1972, %v2020
  %v2022 = vpop.f32.mrb[0].mxu0
  %2023 = vdwg.mxu0
  %v2024 = vadd.f32 %v1000, %v2010
  %v2025 = vadd.f32 %v1001, %v2013
  %v2026 = vadd.f32 %v1002, %v2018
  %v2027 = vadd.f32 %v1003, %v2021
  %2028 = vst [vmem:[%s10] sm:$0xff] %v2024
  %2029 = vst [vmem:[%s10 + $0x8] sm:$0xff] %v2025
  %2030 = vst [vmem:[%s10 + $0x10] sm:$0xff] %v2026
  %2031 = vst [vmem:[%s10 + $0x18] sm:$0xff] %v2027
  // Predicated region
  $region42: #{code_embed_conv_forward.1} parent=0 // pred_check
    _
  $region43: #{code_embed_conv_forward.1} parent=0 // pred_check_branch
    %2033 = sbr.rel (0) target = $region45
  $region44: #{code_embed_conv_forward.1} parent=0 // pred_region
    _
  $region45: #{code_embed_conv_forward.1} parent=0 // pred_fallthru
    _
  // Predicated region
  $region46: #{code_embed_conv_forward.1} parent=0 // pred_check
    _
  $region47: #{code_embed_conv_forward.1} parent=0 // pred_check_branch
    %2035 = sbr.rel (0) target = $region49
  $region48: #{code_embed_conv_forward.1} parent=0 // pred_region
    _
  $region49: #{code_embed_conv_forward.1} parent=0 // pred_fallthru
    _

</llo_original>
